<compile_context>
chip_gen: v7x
topology: tpu7x:2x2x1
jax: 0.10.0
libtpu: 0.0.40
codegen_flags: <defaults>
</compile_context>

<pallas_src>
import jax
import jax.numpy as jnp
from jax.experimental import pallas as pl
from jax.experimental.pallas import tpu as pltpu


_VMEM = pl.BlockSpec(memory_space=pltpu.MemorySpace.VMEM)


# ---------------------------------------------------------------------------
# Once-per-sequence precompute:  es = encoder_outputs @ W_a[:, enc-half]
# (step-invariant; hoisted out of the per-step decode kernel)
# ---------------------------------------------------------------------------
def encoder_proj_kernel(enc_ref, wae_ref, es_ref):
    es_ref[...] = jnp.dot(enc_ref[...], wae_ref[...],
                          preferred_element_type=jnp.float32)


def precompute_encoder_attention(encoder_outputs, wa_e):
    """encoder_outputs: (w, bs, d) -> (enc_b (bs,w,d), es_b (bs,w,d))."""
    w, bs, d = encoder_outputs.shape
    enc_b = jnp.transpose(encoder_outputs, (1, 0, 2))       # (bs, w, d)
    enc_flat = enc_b.reshape(bs * w, d)                     # XLA-side reshape (free)
    es_flat = pl.pallas_call(
        encoder_proj_kernel,
        out_shape=jax.ShapeDtypeStruct((bs * w, d), jnp.float32),
        in_specs=[_VMEM, _VMEM],
        out_specs=_VMEM,
    )(enc_flat, wa_e)
    return enc_b, es_flat.reshape(bs, w, d)


# ---------------------------------------------------------------------------
# Per-step decode kernel: attention + context + single-step LSTM cell
# ---------------------------------------------------------------------------
def decoder_step_kernel(emb_ref, h_ref, c_ref, enc_ref, es_ref,
                        wah_ref, wv_ref, wx_ref, b_ref,
                        outh_ref, outc_ref):
    h = h_ref[...]                       # (bs, d)
    c = c_ref[...]                       # (bs, d)
    enc = enc_ref[...]                   # (bs, w, d)
    es = es_ref[...]                     # (bs, w, d)  precomputed enc @ W_a_enc
    emb = emb_ref[...]                   # (bs, d)     pre-projected embedding
    bs, w, d = enc.shape

    b_a = b_ref[:, :d]                   # (1, d)
    b_lstm = b_ref[:, d:]                # (1, 4d)

    # --- attention: tanh(W_a [h ; enc] + b_a) -> score -> softmax over w ---
    hs = jnp.dot(h, wah_ref[...], preferred_element_type=jnp.float32) + b_a   # (bs, d)
    corr = jnp.tanh(hs[:, None, :] + es)                                      # (bs, w, d)
    # b_v dropped: a constant added to every score cancels in softmax.
    scores = jnp.sum(corr * wv_ref[...], axis=-1)                             # (bs, w)
    scores = scores - jnp.max(scores, axis=-1, keepdims=True)
    p = jnp.exp(scores)
    attn = p / jnp.sum(p, axis=-1, keepdims=True)                             # (bs, w)

    # --- context = attn @ enc   (MXU batched matmul) ---
    ctx = jnp.einsum('bqw,bwd->bqd', attn[:, None, :], enc,
                     preferred_element_type=jnp.float32)[:, 0, :]             # (bs, d)

    # --- single-step LSTM cell: one stacked matmul, x = [emb ; ctx ; h] ---
    x = jnp.concatenate([emb, ctx, h], axis=-1)                               # (bs, 3d)
    gates = jnp.dot(x, wx_ref[...], preferred_element_type=jnp.float32) + b_lstm  # (bs, 4d)
    i = jax.nn.sigmoid(gates[:, 0:d])
    f = jax.nn.sigmoid(gates[:, d:2 * d])
    g = jnp.tanh(gates[:, 2 * d:3 * d])
    o = jax.nn.sigmoid(gates[:, 3 * d:4 * d])
    c_new = f * c + i * g
    h_new = o * jnp.tanh(c_new)

    outh_ref[...] = h_new
    outc_ref[...] = c_new


def decoder_forward(inputs, hidden_states, cell_states, encoder_outputs, prep):
    """Mirrors Decoder.forward.

    inputs:          (bs, 1, 1) int32 token ids
    hidden_states:   (1, bs, d_model)
    cell_states:     (1, bs, d_model)
    encoder_outputs: (w, bs, d_model)
    returns (outputs (bs,1,d), (hidden (1,bs,d), cell (1,bs,d)))
    """
    bs = inputs.shape[0]
    w, _, d = encoder_outputs.shape

    # glue: data-dependent gather from the *pre-projected* embedding table
    ids = inputs[:, 0, 0].astype(jnp.int32)
    emb_x = prep["proj_table"][ids]                          # (bs, d)

    # step-invariant attention projection of the encoder outputs
    # (in multi-step decoding, hoist this call out of the per-step loop)
    enc_b, es_b = precompute_encoder_attention(encoder_outputs, prep["wa_e"])

    h0 = hidden_states[0]                                    # (bs, d)
    c0 = cell_states[0]                                      # (bs, d)

    h_new, c_new = pl.pallas_call(
        decoder_step_kernel,
        out_shape=(jax.ShapeDtypeStruct((bs, d), jnp.float32),
                   jax.ShapeDtypeStruct((bs, d), jnp.float32)),
        in_specs=[_VMEM] * 9,
        out_specs=(_VMEM, _VMEM),
        input_output_aliases={1: 0, 2: 1},                   # h0 -> h_new, c0 -> c_new
        compiler_params=pltpu.CompilerParams(
            vmem_limit_bytes=64 * 1024 * 1024),
    )(emb_x, h0, c0, enc_b, es_b,
      prep["wa_h"], prep["w_v"], prep["w_x"], prep["b_pack"])

    outputs = h_new[:, None, :]                              # (bs, 1, d)
    return outputs, (h_new[None], c_new[None])


# ---------------------------------------------------------------------------
# Parameters
# ---------------------------------------------------------------------------
def init_params(key, vocab_size, embedding_dim, d_model, padding_idx=0):
    ks = jax.random.split(key, 9)
    s = 0.1
    emb_table = (jax.random.normal(ks[0], (vocab_size, embedding_dim)) * s).astype(jnp.float32)
    emb_table = emb_table.at[padding_idx].set(0.0)

    w_emb = (jax.random.normal(ks[1], (embedding_dim, d_model)) * s).astype(jnp.float32)
    b_emb = (jax.random.normal(ks[2], (1, d_model)) * s).astype(jnp.float32)

    # attn: nn.Linear(2d, d); stored pre-transposed (2d, d)
    attn_wt = (jax.random.normal(ks[3], (2 * d_model, d_model)) * s).astype(jnp.float32)
    b_a = (jax.random.normal(ks[4], (1, d_model)) * s).astype(jnp.float32)

    # w_v: nn.Linear(d, 1); stored as a (1, d) row, bias (1, 1)  (nonzero on purpose:
    # the kernel drops it and must still match the reference, since softmax cancels it)
    w_v = (jax.random.normal(ks[5], (1, d_model)) * s).astype(jnp.float32)
    b_v = (jax.random.normal(ks[5], (1, 1)) * s + 0.37).astype(jnp.float32)

    # LSTM(2d -> d): W_ih (2d, 4d) pre-transposed, W_hh (d, 4d), bias (1, 4d) = b_ih + b_hh
    w_ih_t = (jax.random.normal(ks[6], (2 * d_model, 4 * d_model)) * s).astype(jnp.float32)
    w_hh_t = (jax.random.normal(ks[7], (d_model, 4 * d_model)) * s).astype(jnp.float32)
    b_lstm = (jax.random.normal(ks[8], (1, 4 * d_model)) * s).astype(jnp.float32)

    return {
        "emb_table": emb_table, "w_emb": w_emb, "b_emb": b_emb,
        "attn_wt": attn_wt, "b_a": b_a,
        "w_v": w_v, "b_v": b_v,
        "w_ih": w_ih_t, "w_hh": w_hh_t, "b_lstm": b_lstm,
    }


def prepare_decoder_params(params, d_model):
    """Offline folding / packing of parameters for the kernels."""
    # fold the embedding projection into the table: gather gives (bs, d) directly
    proj_table = params["emb_table"] @ params["w_emb"] + params["b_emb"]      # (vocab, d)
    # split attention weight into hidden / encoder halves
    wa_h = params["attn_wt"][:d_model]                                        # (d, d)
    wa_e = params["attn_wt"][d_model:]                                        # (d, d)
    # stack all LSTM input/recurrent weights: x = [emb ; ctx ; h] @ W_x
    w_x = jnp.concatenate([params["w_ih"], params["w_hh"]], axis=0)           # (3d, 4d)
    # pack small biases into one lane-dense input: [b_a | b_lstm]
    b_pack = jnp.concatenate([params["b_a"], params["b_lstm"]], axis=-1)      # (1, 5d)
    return {
        "proj_table": proj_table,
        "wa_h": wa_h, "wa_e": wa_e,
        "w_v": params["w_v"],
        "w_x": w_x, "b_pack": b_pack,
    }


# ---------------------------------------------------------------------------
# Pure-JAX replica of the PyTorch semantics (uses the raw, unfused params)
# ---------------------------------------------------------------------------
def reference_forward(inputs, hidden_states, cell_states, encoder_outputs, params):
    ids = inputs[:, 0, 0].astype(jnp.int32)
    emb = params["emb_table"][ids] @ params["w_emb"] + params["b_emb"]        # (bs, d)

    w, bs, d = encoder_outputs.shape
    h = hidden_states[0]                                                      # (bs, d)
    h_rep = jnp.broadcast_to(h[None], (w, bs, d))
    cat = jnp.concatenate([h_rep, encoder_outputs], axis=-1)                  # (w, bs, 2d)
    corr = jnp.tanh(cat @ params["attn_wt"] + params["b_a"])                  # (w, bs, d)
    scores = (corr @ params["w_v"].T + params["b_v"])[..., 0]                 # (w, bs)
    attn = jax.nn.softmax(scores.T, axis=-1)                                  # (bs, w)
    enc_b = jnp.transpose(encoder_outputs, (1, 0, 2))                         # (bs, w, d)
    ctx = jnp.einsum("bw,bwd->bd", attn, enc_b)                               # (bs, d)

    x = jnp.concatenate([emb, ctx], axis=-1)                                  # (bs, 2d)
    gates = x @ params["w_ih"] + h @ params["w_hh"] + params["b_lstm"]
    i = jax.nn.sigmoid(gates[:, :d])
    f = jax.nn.sigmoid(gates[:, d:2 * d])
    g = jnp.tanh(gates[:, 2 * d:3 * d])
    o = jax.nn.sigmoid(gates[:, 3 * d:4 * d])
    c_new = f * cell_states[0] + i * g
    h_new = o * jnp.tanh(c_new)
    return h_new[:, None, :], (h_new[None], c_new[None])


if __name__ == "__main__":
    # lane-dense small shapes: bs multiple of 8, d_model multiple of 128
    bs, w, d_model, embedding_dim, vocab_size = 8, 8, 128, 32, 50

    key = jax.random.PRNGKey(0)
    k1, k2, k3, k4, kp = jax.random.split(key, 5)
    inputs = jax.random.randint(k1, (bs, 1, 1), 1, vocab_size, dtype=jnp.int32)
    hidden_states = jax.random.normal(k2, (1, bs, d_model), jnp.float32)
    cell_states = jax.random.normal(k3, (1, bs, d_model), jnp.float32)
    encoder_outputs = jax.random.normal(k4, (w, bs, d_model), jnp.float32)

    params = init_params(kp, vocab_size, embedding_dim, d_model, padding_idx=0)
    prep = prepare_decoder_params(params, d_model)

    decode_step = jax.jit(decoder_forward)
    outputs, (h_new, c_new) = decode_step(
        inputs, hidden_states, cell_states, encoder_outputs, prep)
    jax.block_until_ready((outputs, h_new, c_new))

    ref_out, (ref_h, ref_c) = reference_forward(
        inputs, hidden_states, cell_states, encoder_outputs, params)

    assert outputs.shape == (bs, 1, d_model)
    assert h_new.shape == (1, bs, d_model) and c_new.shape == (1, bs, d_model)
    assert jnp.allclose(outputs, ref_out, atol=1e-3, rtol=1e-3)
    assert jnp.allclose(h_new, ref_h, atol=1e-3, rtol=1e-3)
    assert jnp.allclose(c_new, ref_c, atol=1e-3, rtol=1e-3)

    print("KERNEL_OK")
</pallas_src>

<mosaic_0001>
module attributes {stable_mosaic.version = 11 : i64} {
  func.func @encoder_proj_kernel(%arg0: memref<64x128xf32, #tpu.memory_space<vmem>>, %arg1: memref<128x128xf32, #tpu.memory_space<vmem>>, %arg2: memref<64x128xf32, #tpu.memory_space<vmem>>) attributes {dimension_semantics = [], scalar_prefetch = 0 : i64, scratch_operands = 0 : i64, tpu.core_type = #tpu.core_type<tc>} {
    %c0 = arith.constant 0 : index
    %c0_0 = arith.constant 0 : index
    %0 = vector.load %arg0[%c0, %c0_0] : memref<64x128xf32, #tpu.memory_space<vmem>>, vector<64x128xf32>
    %c0_1 = arith.constant 0 : index
    %c0_2 = arith.constant 0 : index
    %1 = vector.load %arg1[%c0_1, %c0_2] : memref<128x128xf32, #tpu.memory_space<vmem>>, vector<128x128xf32>
    %cst = arith.constant dense<0.000000e+00> : vector<64x128xf32>
    %2 = tpu.matmul %0, %1, %cst {dimension_numbers = #tpu.dot_dimension_numbers<[1], [0], [0], [1], [0, 0, 1, 1], [], []>} : vector<64x128xf32>, vector<128x128xf32>, vector<64x128xf32> -> vector<64x128xf32>
    %c0_3 = arith.constant 0 : index
    %c0_4 = arith.constant 0 : index
    %3 = vector.load %arg2[%c0_3, %c0_4] : memref<64x128xf32, #tpu.memory_space<vmem>>, vector<64x128xf32>
    tpu.vector_store %arg2[%c0_3, %c0_4], %2 {strides = array<i32>} : memref<64x128xf32, #tpu.memory_space<vmem>>, vector<64x128xf32>,
    return
  }
}

module attributes {stable_mosaic.version = 11 : i64} {
  func.func @decoder_step_kernel(%arg0: memref<8x128xf32, #tpu.memory_space<vmem>>, %arg1: memref<8x128xf32, #tpu.memory_space<vmem>>, %arg2: memref<8x128xf32, #tpu.memory_space<vmem>>, %arg3: memref<8x8x128xf32, #tpu.memory_space<vmem>>, %arg4: memref<8x8x128xf32, #tpu.memory_space<vmem>>, %arg5: memref<128x128xf32, #tpu.memory_space<vmem>>, %arg6: memref<1x128xf32, #tpu.memory_space<vmem>>, %arg7: memref<384x512xf32, #tpu.memory_space<vmem>>, %arg8: memref<1x640xf32, #tpu.memory_space<vmem>>, %arg9: memref<8x128xf32, #tpu.memory_space<vmem>>, %arg10: memref<8x128xf32, #tpu.memory_space<vmem>>) attributes {dimension_semantics = [], scalar_prefetch = 0 : i64, scratch_operands = 0 : i64, tpu.core_type = #tpu.core_type<tc>} {
    %c0 = arith.constant 0 : index
    %c0_0 = arith.constant 0 : index
    %0 = vector.load %arg1[%c0, %c0_0] : memref<8x128xf32, #tpu.memory_space<vmem>>, vector<8x128xf32>
    %c0_1 = arith.constant 0 : index
    %c0_2 = arith.constant 0 : index
    %1 = vector.load %arg2[%c0_1, %c0_2] : memref<8x128xf32, #tpu.memory_space<vmem>>, vector<8x128xf32>
    %c0_3 = arith.constant 0 : index
    %c0_4 = arith.constant 0 : index
    %c0_5 = arith.constant 0 : index
    %2 = vector.load %arg3[%c0_3, %c0_4, %c0_5] : memref<8x8x128xf32, #tpu.memory_space<vmem>>, vector<8x8x128xf32>
    %c0_6 = arith.constant 0 : index
    %c0_7 = arith.constant 0 : index
    %c0_8 = arith.constant 0 : index
    %3 = vector.load %arg4[%c0_6, %c0_7, %c0_8] : memref<8x8x128xf32, #tpu.memory_space<vmem>>, vector<8x8x128xf32>
    %c0_9 = arith.constant 0 : index
    %c0_10 = arith.constant 0 : index
    %4 = vector.load %arg0[%c0_9, %c0_10] : memref<8x128xf32, #tpu.memory_space<vmem>>, vector<8x128xf32>
    %c0_11 = arith.constant 0 : index
    %c0_12 = arith.constant 0 : index
    %5 = vector.load %arg8[%c0_11, %c0_12] : memref<1x640xf32, #tpu.memory_space<vmem>>, vector<1x128xf32>
    %c0_13 = arith.constant 0 : index
    %c128 = arith.constant 128 : index
    %6 = vector.load %arg8[%c0_13, %c128] : memref<1x640xf32, #tpu.memory_space<vmem>>, vector<1x512xf32>
    %c0_14 = arith.constant 0 : index
    %c0_15 = arith.constant 0 : index
    %7 = vector.load %arg5[%c0_14, %c0_15] : memref<128x128xf32, #tpu.memory_space<vmem>>, vector<128x128xf32>
    %cst = arith.constant dense<0.000000e+00> : vector<8x128xf32>
    %8 = tpu.matmul %0, %7, %cst {dimension_numbers = #tpu.dot_dimension_numbers<[1], [0], [0], [1], [0, 0, 1, 1], [], []>} : vector<8x128xf32>, vector<128x128xf32>, vector<8x128xf32> -> vector<8x128xf32>
    %9 = vector.broadcast %5 : vector<1x128xf32> to vector<8x128xf32>
    %10 = arith.addf %8, %9 : vector<8x128xf32>
    %11 = vector.shape_cast %10 : vector<8x128xf32> to vector<8x1x128xf32>
    %12 = vector.broadcast %11 : vector<8x1x128xf32> to vector<8x8x128xf32>
    %13 = arith.addf %12, %3 : vector<8x8x128xf32>
    %14 = math.tanh %13 : vector<8x8x128xf32>
    %c0_16 = arith.constant 0 : index
    %c0_17 = arith.constant 0 : index
    %15 = vector.load %arg6[%c0_16, %c0_17] : memref<1x128xf32, #tpu.memory_space<vmem>>, vector<1x128xf32>
    %16 = vector.shape_cast %15 : vector<1x128xf32> to vector<1x1x128xf32>
    %17 = vector.broadcast %16 : vector<1x1x128xf32> to vector<8x8x128xf32>
    %18 = arith.mulf %14, %17 : vector<8x8x128xf32>
    %cst_18 = arith.constant dense<0.000000e+00> : vector<8x8xf32>
    %19 = vector.multi_reduction <add>, %18, %cst_18 [2] : vector<8x8x128xf32> to vector<8x8xf32>
    %cst_19 = arith.constant dense<0xFF800000> : vector<8xf32>
    %20 = vector.multi_reduction <maximumf>, %19, %cst_19 [1] : vector<8x8xf32> to vector<8xf32>
    %21 = vector.shape_cast %20 : vector<8xf32> to vector<8x1xf32>
    %22 = vector.broadcast %21 : vector<8x1xf32> to vector<8x8xf32>
    %23 = arith.subf %19, %22 : vector<8x8xf32>
    %24 = math.exp %23 : vector<8x8xf32>
    %cst_20 = arith.constant dense<0.000000e+00> : vector<8xf32>
    %25 = vector.multi_reduction <add>, %24, %cst_20 [1] : vector<8x8xf32> to vector<8xf32>
    %26 = vector.shape_cast %25 : vector<8xf32> to vector<8x1xf32>
    %27 = vector.broadcast %26 : vector<8x1xf32> to vector<8x8xf32>
    %28 = arith.divf %24, %27 : vector<8x8xf32>
    %29 = vector.shape_cast %28 : vector<8x8xf32> to vector<8x1x8xf32>
    "tpu.trace_start"() <{level = 10 : i32, message = "bqw,bwd->bqd"}> : () -> ()
    %cst_21 = arith.constant dense<0.000000e+00> : vector<8x1x128xf32>
    %30 = tpu.matmul %29, %2, %cst_21 {dimension_numbers = #tpu.dot_dimension_numbers<[2], [1], [1], [2], [0, 0, 0, 1, 1, 2], [0], [0]>} : vector<8x1x8xf32>, vector<8x8x128xf32>, vector<8x1x128xf32> -> vector<8x1x128xf32>
    "tpu.trace_stop"() : () -> ()
    %31 = vector.shape_cast %30 : vector<8x1x128xf32> to vector<8x128xf32>
    %32 = tpu.concatenate %4, %31, %0 in 1 : vector<8x128xf32>, vector<8x128xf32>, vector<8x128xf32> -> vector<8x384xf32>
    %c0_22 = arith.constant 0 : index
    %c0_23 = arith.constant 0 : index
    %33 = vector.load %arg7[%c0_22, %c0_23] : memref<384x512xf32, #tpu.memory_space<vmem>>, vector<384x512xf32>
    %cst_24 = arith.constant dense<0.000000e+00> : vector<8x512xf32>
    %34 = tpu.matmul %32, %33, %cst_24 {dimension_numbers = #tpu.dot_dimension_numbers<[1], [0], [0], [1], [0, 0, 1, 1], [], []>} : vector<8x384xf32>, vector<384x512xf32>, vector<8x512xf32> -> vector<8x512xf32>
    %35 = vector.broadcast %6 : vector<1x512xf32> to vector<8x512xf32>
    %36 = arith.addf %34, %35 : vector<8x512xf32>
    %37 = vector.extract_strided_slice %36 {offsets = [0, 0], sizes = [8, 128], strides = [1, 1]} : vector<8x512xf32> to vector<8x128xf32>
    %38 = arith.negf %37 : vector<8x128xf32>
    %39 = math.exp %38 : vector<8x128xf32>
    %cst_25 = arith.constant 1.000000e+00 : f32
    %40 = vector.broadcast %cst_25 : f32 to vector<8x128xf32>
    %41 = arith.addf %40, %39 : vector<8x128xf32>
    %42 = arith.divf %40, %41 : vector<8x128xf32>
    %43 = vector.extract_strided_slice %36 {offsets = [0, 128], sizes = [8, 128], strides = [1, 1]} : vector<8x512xf32> to vector<8x128xf32>
    %44 = arith.negf %43 : vector<8x128xf32>
    %45 = math.exp %44 : vector<8x128xf32>
    %cst_26 = arith.constant 1.000000e+00 : f32
    %46 = vector.broadcast %cst_26 : f32 to vector<8x128xf32>
    %47 = arith.addf %46, %45 : vector<8x128xf32>
    %48 = arith.divf %46, %47 : vector<8x128xf32>
    %49 = vector.extract_strided_slice %36 {offsets = [0, 256], sizes = [8, 128], strides = [1, 1]} : vector<8x512xf32> to vector<8x128xf32>
    %50 = math.tanh %49 : vector<8x128xf32>
    %51 = vector.extract_strided_slice %36 {offsets = [0, 384], sizes = [8, 128], strides = [1, 1]} : vector<8x512xf32> to vector<8x128xf32>
    %52 = arith.negf %51 : vector<8x128xf32>
    %53 = math.exp %52 : vector<8x128xf32>
    %cst_27 = arith.constant 1.000000e+00 : f32
    %54 = vector.broadcast %cst_27 : f32 to vector<8x128xf32>
    %55 = arith.addf %54, %53 : vector<8x128xf32>
    %56 = arith.divf %54, %55 : vector<8x128xf32>
    %57 = arith.mulf %48, %1 : vector<8x128xf32>
    %58 = arith.mulf %42, %50 : vector<8x128xf32>
    %59 = arith.addf %57, %58 : vector<8x128xf32>
    %60 = math.tanh %59 : vector<8x128xf32>
    %61 = arith.mulf %56, %60 : vector<8x128xf32>
    %c0_28 = arith.constant 0 : index
    %c0_29 = arith.constant 0 : index
    %62 = vector.load %arg9[%c0_28, %c0_29] : memref<8x128xf32, #tpu.memory_space<vmem>>, vector<8x128xf32>
    tpu.vector_store %arg9[%c0_28, %c0_29], %61 {strides = array<i32>} : memref<8x128xf32, #tpu.memory_space<vmem>>, vector<8x128xf32>,
    %c0_30 = arith.constant 0 : index
    %c0_31 = arith.constant 0 : index
    %63 = vector.load %arg10[%c0_30, %c0_31] : memref<8x128xf32, #tpu.memory_space<vmem>>, vector<8x128xf32>
    tpu.vector_store %arg10[%c0_30, %c0_31], %59 {strides = array<i32>} : memref<8x128xf32, #tpu.memory_space<vmem>>, vector<8x128xf32>,
    return
  }
}

</mosaic_0001>

<llo_original>
// kernel: decoder_forward.2
$region0: #{decoder_forward.2}
  #allocation0 [shape = 'u32[]', space=smem, size = 0x4, offset = 0x4, fixed_abs, tag = 'smem constant byte address 0x4 - core index']
  #allocation1 [shape = 'u32[144,128]{1,0:T(1,128)}', space=vmem, size = 0x12000, scoped, tag = 'internal scratch']
  %s0 = inlined_call_operand.vmem [shape: f32[64,128], index: 0, kind: input, shape index: {}]
  %s1 = inlined_call_operand.vmem [shape: f32[128,128], index: 1, kind: input, shape index: {}]
  %s2 = inlined_call_operand.hbm [shape: f32[64,128], index: 2, kind: output, shape index: {}]
  %s3 = sld [smem:[#allocation0]]
  $region18: #{decoder_forward.2} parent=0
    _
  %s5 = ssub.s32 1, %s3
  %s6 = scalar_select 0, %s5, %s3
  $region1: #{decoder_forward.2} parent=0
    #allocation2 [shape = 'u8[32768]{0}', space=vmem, size = 0x8000, scoped, tag = 'output window, operand 0, single buffered']
    #allocation3 [shape = 's32[1]{0}', space=sflag, size = 0x4, scoped, tag = 'scoped memory for decoder_forward.2']
    %7 = vsyncpa [#allocation3], 0
    // Predicated region
    $region2: #{decoder_forward.2} parent=1 // pred_check
      _
    $region3: #{decoder_forward.2} parent=1 // pred_check_branch
      %9 = sbr.rel (0) target = $region5
    $region4: #{decoder_forward.2} parent=1 // pred_region
      _
    $region5: #{decoder_forward.2} parent=1 // pred_fallthru
      _
    // Predicated region
    $region6: #{decoder_forward.2} parent=1 // pred_check
      _
    $region7: #{decoder_forward.2} parent=1 // pred_check_branch
      %11 = sbr.rel (0) target = $region9
    $region8: #{decoder_forward.2} parent=1 // pred_region
      _
    $region9: #{decoder_forward.2} parent=1 // pred_fallthru
      _
    %v12 = vld [vmem:[%s0] sm:$0xff]
    %v13 = vld [vmem:[%s0 + $0x8] sm:$0xff]
    %v14 = vld [vmem:[%s0 + $0x10] sm:$0xff]
    %v15 = vld [vmem:[%s0 + $0x18] sm:$0xff]
    %v16 = vld [vmem:[%s0 + $0x20] sm:$0xff]
    %v17 = vld [vmem:[%s0 + $0x28] sm:$0xff]
    %v18 = vld [vmem:[%s0 + $0x30] sm:$0xff]
    %v19 = vld [vmem:[%s0 + $0x38] sm:$0xff]
    %v20 = vld [vmem:[%s1] sm:$0xff]
    %v21 = vld [vmem:[%s1 + $0x8] sm:$0xff]
    %v22 = vld [vmem:[%s1 + $0x10] sm:$0xff]
    %v23 = vld [vmem:[%s1 + $0x18] sm:$0xff]
    %v24 = vld [vmem:[%s1 + $0x20] sm:$0xff]
    %v25 = vld [vmem:[%s1 + $0x28] sm:$0xff]
    %v26 = vld [vmem:[%s1 + $0x30] sm:$0xff]
    %v27 = vld [vmem:[%s1 + $0x38] sm:$0xff]
    %v28 = vld [vmem:[%s1 + $0x40] sm:$0xff]
    %v29 = vld [vmem:[%s1 + $0x48] sm:$0xff]
    %v30 = vld [vmem:[%s1 + $0x50] sm:$0xff]
    %v31 = vld [vmem:[%s1 + $0x58] sm:$0xff]
    %v32 = vld [vmem:[%s1 + $0x60] sm:$0xff]
    %v33 = vld [vmem:[%s1 + $0x68] sm:$0xff]
    %v34 = vld [vmem:[%s1 + $0x70] sm:$0xff]
    %v35 = vld [vmem:[%s1 + $0x78] sm:$0xff]
    %36 = vmatprep.subr.mxu0 0.0
    %37 = vmatpush1.msra.mxu0 %v20
    %38 = vmatprep.subr.mxu0 0.0
    %39 = vmatpush1.msra.mxu0 %v21
    %40 = vmatprep.subr.mxu0 0.0
    %41 = vmatpush1.msra.mxu0 %v22
    %42 = vmatprep.subr.mxu0 0.0
    %43 = vmatpush1.msra.mxu0 %v23
    %44 = vmatprep.subr.mxu0 0.0
    %45 = vmatpush1.msra.mxu0 %v24
    %46 = vmatprep.subr.mxu0 0.0
    %47 = vmatpush1.msra.mxu0 %v25
    %48 = vmatprep.subr.mxu0 0.0
    %49 = vmatpush1.msra.mxu0 %v26
    %50 = vmatprep.subr.mxu0 0.0
    %51 = vmatpush1.msra.mxu0 %v27
    %52 = vmatprep.subr.mxu0 0.0
    %53 = vmatpush1.msra.mxu0 %v28
    %54 = vmatprep.subr.mxu0 0.0
    %55 = vmatpush1.msra.mxu0 %v29
    %56 = vmatprep.subr.mxu0 0.0
    %57 = vmatpush1.msra.mxu0 %v30
    %58 = vmatprep.subr.mxu0 0.0
    %59 = vmatpush1.msra.mxu0 %v31
    %60 = vmatprep.subr.mxu0 0.0
    %61 = vmatpush1.msra.mxu0 %v32
    %62 = vmatprep.subr.mxu0 0.0
    %63 = vmatpush1.msra.mxu0 %v33
    %64 = vmatprep.subr.mxu0 0.0
    %65 = vmatpush1.msra.mxu0 %v34
    %66 = vmatprep.subr.mxu0 0.0
    %67 = vmatpush1.msra.mxu0 %v35
    %68 = vmatprep.subr.mxu0 0.0
    %69 = vmatpush1.msra.mxu0 0.0
    %70 = vmatprep.subr.mxu0 0.0
    %71 = vmatpush1.msra.mxu0 0.0
    %72 = vmatprep.subr.mxu0 0.0
    %73 = vmatpush1.msra.mxu0 0.0
    %74 = vmatprep.subr.mxu0 0.0
    %75 = vmatpush1.msra.mxu0 0.0
    %76 = vmatprep.subr.mxu0 0.0
    %77 = vmatpush1.msra.mxu0 0.0
    %78 = vmatprep.subr.mxu0 0.0
    %79 = vmatpush1.msra.mxu0 0.0
    %80 = vmatprep.subr.mxu0 0.0
    %81 = vmatpush1.msra.mxu0 0.0
    %82 = vmatprep.subr.mxu0 0.0
    %83 = vmatpush1.msra.mxu0 0.0
    %84 = vmatprep.subr.mxu0 0.0
    %85 = vmatpush1.msra.mxu0 0.0
    %86 = vmatprep.subr.mxu0 0.0
    %87 = vmatpush1.msra.mxu0 0.0
    %88 = vmatprep.subr.mxu0 0.0
    %89 = vmatpush1.msra.mxu0 0.0
    %90 = vmatprep.subr.mxu0 0.0
    %91 = vmatpush1.msra.mxu0 0.0
    %92 = vmatprep.subr.mxu0 0.0
    %93 = vmatpush1.msra.mxu0 0.0
    %94 = vmatprep.subr.mxu0 0.0
    %95 = vmatpush1.msra.mxu0 0.0
    %96 = vmatprep.subr.mxu0 0.0
    %97 = vmatpush1.msra.mxu0 0.0
    %98 = vmatprep.subr.mxu0 0.0
    %99 = vmatpush1.msra.mxu0 0.0
    %100 = vmatprep.mubr.f32.mxu0 0.0
    %101 = vmatmul.mubr.f32.gmra.mrb[0].mxu0 %v12
    %v102 = vpop.f32.mrb[0].mxu0
    %v103 = vadd.f32 0.0, %v102
    %v104 = vpop.f32.mrb[0].mxu0
    %105 = vmatprep.mubr.f32.mxu0 0.0
    %106 = vmatmul.mubr.f32.gmra.mrb[0].mxu0 %v13
    %v107 = vpop.f32.mrb[0].mxu0
    %v108 = vadd.f32 0.0, %v107
    %v109 = vpop.f32.mrb[0].mxu0
    %110 = vmatprep.mubr.f32.mxu0 0.0
    %111 = vmatmul.mubr.f32.gmra.mrb[0].mxu0 %v14
    %v112 = vpop.f32.mrb[0].mxu0
    %v113 = vadd.f32 0.0, %v112
    %v114 = vpop.f32.mrb[0].mxu0
    %115 = vmatprep.mubr.f32.mxu0 0.0
    %116 = vmatmul.mubr.f32.gmra.mrb[0].mxu0 %v15
    %v117 = vpop.f32.mrb[0].mxu0
    %v118 = vadd.f32 0.0, %v117
    %v119 = vpop.f32.mrb[0].mxu0
    %120 = vmatprep.mubr.f32.mxu0 0.0
    %121 = vmatmul.mubr.f32.gmra.mrb[0].mxu0 %v16
    %v122 = vpop.f32.mrb[0].mxu0
    %v123 = vadd.f32 0.0, %v122
    %v124 = vpop.f32.mrb[0].mxu0
    %125 = vmatprep.mubr.f32.mxu0 0.0
    %126 = vmatmul.mubr.f32.gmra.mrb[0].mxu0 %v17
    %v127 = vpop.f32.mrb[0].mxu0
    %v128 = vadd.f32 0.0, %v127
    %v129 = vpop.f32.mrb[0].mxu0
    %130 = vmatprep.mubr.f32.mxu0 0.0
    %131 = vmatmul.mubr.f32.gmra.mrb[0].mxu0 %v18
    %v132 = vpop.f32.mrb[0].mxu0
    %v133 = vadd.f32 0.0, %v132
    %v134 = vpop.f32.mrb[0].mxu0
    %135 = vmatprep.mubr.f32.mxu0 0.0
    %136 = vmatmul.mubr.f32.gmra.mrb[0].mxu0 %v19
    %v137 = vpop.f32.mrb[0].mxu0
    %v138 = vadd.f32 0.0, %v137
    %v139 = vpop.f32.mrb[0].mxu0
    %140 = vdwg.mxu0
    %141 = vst [vmem:[#allocation2] sm:$0xff] %v103
    %142 = vst [vmem:[#allocation2 + $0x8] sm:$0xff] %v108
    %143 = vst [vmem:[#allocation2 + $0x10] sm:$0xff] %v113
    %144 = vst [vmem:[#allocation2 + $0x18] sm:$0xff] %v118
    %145 = vst [vmem:[#allocation2 + $0x20] sm:$0xff] %v123
    %146 = vst [vmem:[#allocation2 + $0x28] sm:$0xff] %v128
    %147 = vst [vmem:[#allocation2 + $0x30] sm:$0xff] %v133
    %148 = vst [vmem:[#allocation2 + $0x38] sm:$0xff] %v138
    // Predicated region
    $region10: #{decoder_forward.2} parent=1 // pred_check
      _
    $region11: #{decoder_forward.2} parent=1 // pred_check_branch
      %150 = sbr.rel (0) target = $region13
    $region12: #{decoder_forward.2} parent=1 // pred_region
      %s152 = ssub.s32 1024, 1024
      %153 = vsyncadd [#allocation3], %s152
      %s154 = sshll.u32 [#allocation2], 4
      %s155 = int_to_ptr.vmem [resolvable:$true] %s154
      %160 = dma.vmem_to_hbm [thread:$0]  %s155, 1024, %s2, [#allocation3], 128, 128, 8
    $region13: #{decoder_forward.2} parent=1 // pred_fallthru
      _
    // Predicated region
    $region14: #{decoder_forward.2} parent=1 // pred_check
      _
    $region15: #{decoder_forward.2} parent=1 // pred_check_branch
      %162 = sbr.rel (0) target = $region17
    $region16: #{decoder_forward.2} parent=1 // pred_region
      %163 = dma.done [#allocation3], 1024
    $region17: #{decoder_forward.2} parent=1 // pred_fallthru
      _
    %164 = vsyncpa [#allocation3], 1

// kernel: decoder_forward.3
$region0: #{decoder_forward.3}
  #allocation0 [shape = 'u32[]', space=smem, size = 0x4, offset = 0x4, fixed_abs, tag = 'smem constant byte address 0x4 - core index']
  #allocation1 [shape = 'u32[144,128]{1,0:T(1,128)}', space=vmem, size = 0x12000, scoped, tag = 'internal scratch']
  %s0 = inlined_call_operand.hbm [shape: f32[8,128], index: 0, kind: input, shape index: {}]
  %s1 = inlined_call_operand.hbm [shape: f32[8,128], index: 1, kind: input, shape index: {}, may-alias: {1,9}]
  %s2 = inlined_call_operand.hbm [shape: f32[8,128], index: 2, kind: input, shape index: {}, may-alias: {2,10}]
  %s3 = inlined_call_operand.hbm [shape: f32[8,8,128], index: 3, kind: input, shape index: {}]
  %s4 = inlined_call_operand.hbm [shape: f32[8,8,128], index: 4, kind: input, shape index: {}]
  %s5 = inlined_call_operand.hbm [shape: f32[128,128], index: 5, kind: input, shape index: {}]
  %s6 = inlined_call_operand.hbm [shape: f32[1,128], index: 6, kind: input, shape index: {}]
  %s7 = inlined_call_operand.hbm [shape: f32[384,512], index: 7, kind: input, shape index: {}]
  %s8 = inlined_call_operand.hbm [shape: f32[1,640], index: 8, kind: input, shape index: {}]
  %s9 = inlined_call_operand.hbm [shape: f32[8,128], index: 9, kind: output, shape index: {0}, may-alias: {1,9}]
  %s10 = inlined_call_operand.hbm [shape: f32[8,128], index: 10, kind: output, shape index: {1}, may-alias: {2,10}]
  %11 = xla_tuple %s9, %s10
  %s12 = sld [smem:[#allocation0]]
  $region90: #{decoder_forward.3} parent=0
    _
  %s14 = ssub.s32 1, %s12
  %s15 = scalar_select 0, %s14, %s12
  $region1: #{decoder_forward.3} parent=0
    #allocation2 [shape = 'u8[4096]{0}', space=vmem, size = 0x1000, scoped, tag = 'input window, operand 0, single buffered']
    #allocation3 [shape = 's32[1]{0}', space=sflag, size = 0x4, scoped, tag = 'scoped memory for decoder_forward.3']
    #allocation4 [shape = 's32[1]{0}', space=sflag, size = 0x4, scoped, tag = 'scoped memory for decoder_forward.3']
    #allocation5 [shape = 'u8[4096]{0}', space=vmem, size = 0x1000, scoped, tag = 'input window, operand 1, single buffered']
    #allocation6 [shape = 's32[1]{0}', space=sflag, size = 0x4, scoped, tag = 'scoped memory for decoder_forward.3']
    #allocation7 [shape = 'u8[4096]{0}', space=vmem, size = 0x1000, scoped, tag = 'input window, operand 2, single buffered']
    #allocation8 [shape = 'u8[32768]{0}', space=vmem, size = 0x8000, scoped, tag = 'input window, operand 3, single buffered']
    #allocation9 [shape = 's32[1]{0}', space=sflag, size = 0x4, scoped, tag = 'scoped memory for decoder_forward.3']
    #allocation10 [shape = 'u8[32768]{0}', space=vmem, size = 0x8000, scoped, tag = 'input window, operand 4, single buffered']
    #allocation11 [shape = 'u8[65536]{0}', space=vmem, size = 0x10000, scoped, tag = 'input window, operand 5, single buffered']
    #allocation12 [shape = 's32[1]{0}', space=sflag, size = 0x4, scoped, tag = 'scoped memory for decoder_forward.3']
    #allocation13 [shape = 'u8[512]{0}', space=vmem, size = 0x400, scoped, tag = 'input window, operand 6, single buffered']
    #allocation14 [shape = 'u8[786432]{0}', space=vmem, size = 0xc0000, scoped, tag = 'input window, operand 7, single buffered']
    #allocation15 [shape = 's32[1]{0}', space=sflag, size = 0x4, scoped, tag = 'scoped memory for decoder_forward.3']
    #allocation16 [shape = 'u8[2560]{0}', space=vmem, size = 0xc00, scoped, tag = 'input window, operand 8, single buffered']
    #allocation17 [shape = 'u8[4096]{0}', space=vmem, size = 0x1000, scoped, tag = 'output window, operand 0, single buffered']
    #allocation18 [shape = 'u8[4096]{0}', space=vmem, size = 0x1000, scoped, tag = 'output window, operand 1, single buffered']
    #allocation19 [shape = 's32[1]{0}', space=sflag, size = 0x4, scoped, tag = 'scoped memory for decoder_forward.3']
    %16 = vsyncpa [#allocation3], 0
    %17 = vsyncpa [#allocation6], 0
    %18 = vsyncpa [#allocation9], 0
    %19 = vsyncpa [#allocation12], 0
    %20 = vsyncpa [#allocation15], 0
    %21 = vsyncpa [#allocation4], 0
    %22 = vsyncpa [#allocation19], 0
    // Predicated region
    $region2: #{decoder_forward.3} parent=1 // pred_check
      _
    $region3: #{decoder_forward.3} parent=1 // pred_check_branch
      %24 = sbr.rel (0) target = $region5
    $region4: #{decoder_forward.3} parent=1 // pred_region
      %s26 = ssub.s32 128, 128
      %27 = vsyncadd [#allocation3], %s26
      %s29 = sshll.u32 [#allocation2], 4
      %s30 = int_to_ptr.vmem [resolvable:$true] %s29
      %32 = dma.hbm_to_vmem [thread:$0]  %s0, 128, %s30, [#allocation3]
    $region5: #{decoder_forward.3} parent=1 // pred_fallthru
      _
    // Predicated region
    $region6: #{decoder_forward.3} parent=1 // pred_check
      _
    $region7: #{decoder_forward.3} parent=1 // pred_check_branch
      %34 = sbr.rel (0) target = $region9
    $region8: #{decoder_forward.3} parent=1 // pred_region
      %s36 = ssub.s32 128, 128
      %37 = vsyncadd [#allocation6], %s36
      %s39 = sshll.u32 [#allocation5], 4
      %s40 = int_to_ptr.vmem [resolvable:$true] %s39
      %42 = dma.hbm_to_vmem [thread:$0]  %s1, 128, %s40, [#allocation6]
    $region9: #{decoder_forward.3} parent=1 // pred_fallthru
      _
    // Predicated region
    $region10: #{decoder_forward.3} parent=1 // pred_check
      _
    $region11: #{decoder_forward.3} parent=1 // pred_check_branch
      %44 = sbr.rel (0) target = $region13
    $region12: #{decoder_forward.3} parent=1 // pred_region
      %s46 = ssub.s32 128, 128
      %47 = vsyncadd [#allocation6], %s46
      %s49 = sshll.u32 [#allocation7], 4
      %s50 = int_to_ptr.vmem [resolvable:$true] %s49
      %52 = dma.hbm_to_vmem [thread:$0]  %s2, 128, %s50, [#allocation6]
    $region13: #{decoder_forward.3} parent=1 // pred_fallthru
      _
    // Predicated region
    $region14: #{decoder_forward.3} parent=1 // pred_check
      _
    $region15: #{decoder_forward.3} parent=1 // pred_check_branch
      %54 = sbr.rel (0) target = $region17
    $region16: #{decoder_forward.3} parent=1 // pred_region
      %s56 = ssub.s32 1024, 1024
      %57 = vsyncadd [#allocation9], %s56
      %s58 = sshll.u32 [#allocation8], 4
      %s59 = int_to_ptr.vmem [resolvable:$true] %s58
      %64 = dma.hbm_to_vmem [thread:$0]  %s3, 1024, %s59, [#allocation9], 128, 128, 8
    $region17: #{decoder_forward.3} parent=1 // pred_fallthru
      _
    // Predicated region
    $region18: #{decoder_forward.3} parent=1 // pred_check
      _
    $region19: #{decoder_forward.3} parent=1 // pred_check_branch
      %66 = sbr.rel (0) target = $region21
    $region20: #{decoder_forward.3} parent=1 // pred_region
      %s68 = ssub.s32 1024, 1024
      %69 = vsyncadd [#allocation9], %s68
      %s70 = sshll.u32 [#allocation10], 4
      %s71 = int_to_ptr.vmem [resolvable:$true] %s70
      %76 = dma.hbm_to_vmem [thread:$0]  %s4, 1024, %s71, [#allocation9], 128, 128, 8
    $region21: #{decoder_forward.3} parent=1 // pred_fallthru
      _
    // Predicated region
    $region22: #{decoder_forward.3} parent=1 // pred_check
      _
    $region23: #{decoder_forward.3} parent=1 // pred_check_branch
      %78 = sbr.rel (0) target = $region25
    $region24: #{decoder_forward.3} parent=1 // pred_region
      %s80 = ssub.s32 2048, 2048
      %81 = vsyncadd [#allocation12], %s80
      %s82 = sshll.u32 [#allocation11], 4
      %s83 = int_to_ptr.vmem [resolvable:$true] %s82
      %88 = dma.hbm_to_vmem [thread:$0]  %s5, 2048, %s83, [#allocation12], 128, 128, 8
    $region25: #{decoder_forward.3} parent=1 // pred_fallthru
      _
    // Predicated region
    $region26: #{decoder_forward.3} parent=1 // pred_check
      _
    $region27: #{decoder_forward.3} parent=1 // pred_check_branch
      %90 = sbr.rel (0) target = $region29
    $region28: #{decoder_forward.3} parent=1 // pred_region
      %s92 = ssub.s32 16, 16
      %93 = vsyncadd [#allocation12], %s92
      %s95 = sshll.u32 [#allocation13], 4
      %s96 = int_to_ptr.vmem [resolvable:$true] %s95
      %98 = dma.hbm_to_vmem [thread:$0]  %s6, 16, %s96, [#allocation12]
    $region29: #{decoder_forward.3} parent=1 // pred_fallthru
      _
    // Predicated region
    $region30: #{decoder_forward.3} parent=1 // pred_check
      _
    $region31: #{decoder_forward.3} parent=1 // pred_check_branch
      %100 = sbr.rel (0) target = $region33
    $region32: #{decoder_forward.3} parent=1 // pred_region
      %s102 = ssub.s32 24576, 24576
      %103 = vsyncadd [#allocation15], %s102
      %s104 = sshll.u32 [#allocation14], 4
      %s105 = int_to_ptr.vmem [resolvable:$true] %s104
      %110 = dma.hbm_to_vmem [thread:$0]  %s7, 24576, %s105, [#allocation15], 512, 512, 32
    $region33: #{decoder_forward.3} parent=1 // pred_fallthru
      _
    // Predicated region
    $region34: #{decoder_forward.3} parent=1 // pred_check
      _
    $region35: #{decoder_forward.3} parent=1 // pred_check_branch
      %112 = sbr.rel (0) target = $region37
    $region36: #{decoder_forward.3} parent=1 // pred_region
      %s114 = ssub.s32 80, 80
      %115 = vsyncadd [#allocation15], %s114
      %s117 = sshll.u32 [#allocation16], 4
      %s118 = int_to_ptr.vmem [resolvable:$true] %s117
      %120 = dma.hbm_to_vmem [thread:$0]  %s8, 80, %s118, [#allocation15]
    $region37: #{decoder_forward.3} parent=1 // pred_fallthru
      _
    // Predicated region
    $region38: #{decoder_forward.3} parent=1 // pred_check
      _
    $region39: #{decoder_forward.3} parent=1 // pred_check_branch
      %122 = sbr.rel (0) target = $region41
    $region40: #{decoder_forward.3} parent=1 // pred_region
      %123 = dma.done [#allocation3], 128
    $region41: #{decoder_forward.3} parent=1 // pred_fallthru
      _
    // Predicated region
    $region42: #{decoder_forward.3} parent=1 // pred_check
      _
    $region43: #{decoder_forward.3} parent=1 // pred_check_branch
      %125 = sbr.rel (0) target = $region45
    $region44: #{decoder_forward.3} parent=1 // pred_region
      %126 = dma.done [#allocation6], 128
    $region45: #{decoder_forward.3} parent=1 // pred_fallthru
      _
    // Predicated region
    $region46: #{decoder_forward.3} parent=1 // pred_check
      _
    $region47: #{decoder_forward.3} parent=1 // pred_check_branch
      %128 = sbr.rel (0) target = $region49
    $region48: #{decoder_forward.3} parent=1 // pred_region
      %129 = dma.done [#allocation6], 128
    $region49: #{decoder_forward.3} parent=1 // pred_fallthru
      _
    // Predicated region
    $region50: #{decoder_forward.3} parent=1 // pred_check
      _
    $region51: #{decoder_forward.3} parent=1 // pred_check_branch
      %131 = sbr.rel (0) target = $region53
    $region52: #{decoder_forward.3} parent=1 // pred_region
      %132 = dma.done [#allocation9], 1024
    $region53: #{decoder_forward.3} parent=1 // pred_fallthru
      _
    // Predicated region
    $region54: #{decoder_forward.3} parent=1 // pred_check
      _
    $region55: #{decoder_forward.3} parent=1 // pred_check_branch
      %134 = sbr.rel (0) target = $region57
    $region56: #{decoder_forward.3} parent=1 // pred_region
      %135 = dma.done [#allocation9], 1024
    $region57: #{decoder_forward.3} parent=1 // pred_fallthru
      _
    // Predicated region
    $region58: #{decoder_forward.3} parent=1 // pred_check
      _
    $region59: #{decoder_forward.3} parent=1 // pred_check_branch
      %137 = sbr.rel (0) target = $region61
    $region60: #{decoder_forward.3} parent=1 // pred_region
      %138 = dma.done [#allocation12], 2048
    $region61: #{decoder_forward.3} parent=1 // pred_fallthru
      _
    // Predicated region
    $region62: #{decoder_forward.3} parent=1 // pred_check
      _
    $region63: #{decoder_forward.3} parent=1 // pred_check_branch
      %140 = sbr.rel (0) target = $region65
    $region64: #{decoder_forward.3} parent=1 // pred_region
      %141 = dma.done [#allocation12], 16
    $region65: #{decoder_forward.3} parent=1 // pred_fallthru
      _
    // Predicated region
    $region66: #{decoder_forward.3} parent=1 // pred_check
      _
    $region67: #{decoder_forward.3} parent=1 // pred_check_branch
      %143 = sbr.rel (0) target = $region69
    $region68: #{decoder_forward.3} parent=1 // pred_region
      %144 = dma.done [#allocation15], 24576
    $region69: #{decoder_forward.3} parent=1 // pred_fallthru
      _
    // Predicated region
    $region70: #{decoder_forward.3} parent=1 // pred_check
      _
    $region71: #{decoder_forward.3} parent=1 // pred_check_branch
      %146 = sbr.rel (0) target = $region73
    $region72: #{decoder_forward.3} parent=1 // pred_region
      %147 = dma.done [#allocation15], 80
    $region73: #{decoder_forward.3} parent=1 // pred_fallthru
      _
    %v148 = vld [vmem:[#allocation5] sm:$0xff]
    %v149 = vld [vmem:[#allocation7] sm:$0xff]
    %v150 = vld [vmem:[#allocation8] sm:$0xff]
    %v151 = vld [vmem:[#allocation8 + $0x8] sm:$0xff]
    %v152 = vld [vmem:[#allocation8 + $0x10] sm:$0xff]
    %v153 = vld [vmem:[#allocation8 + $0x18] sm:$0xff]
    %v154 = vld [vmem:[#allocation8 + $0x20] sm:$0xff]
    %v155 = vld [vmem:[#allocation8 + $0x28] sm:$0xff]
    %v156 = vld [vmem:[#allocation8 + $0x30] sm:$0xff]
    %v157 = vld [vmem:[#allocation8 + $0x38] sm:$0xff]
    %v158 = vld [vmem:[#allocation10] sm:$0xff]
    %v159 = vld [vmem:[#allocation10 + $0x8] sm:$0xff]
    %v160 = vld [vmem:[#allocation10 + $0x10] sm:$0xff]
    %v161 = vld [vmem:[#allocation10 + $0x18] sm:$0xff]
    %v162 = vld [vmem:[#allocation10 + $0x20] sm:$0xff]
    %v163 = vld [vmem:[#allocation10 + $0x28] sm:$0xff]
    %v164 = vld [vmem:[#allocation10 + $0x30] sm:$0xff]
    %v165 = vld [vmem:[#allocation10 + $0x38] sm:$0xff]
    %v166 = vld [vmem:[#allocation2] sm:$0xff]
    %v167 = vld [vmem:[#allocation16] sm:$0x1]
    %v168 = vld [vmem:[#allocation16 + $0x1] sm:$0xf]
    %v169 = vld [vmem:[#allocation11] sm:$0xff]
    %v170 = vld [vmem:[#allocation11 + $0x8] sm:$0xff]
    %v171 = vld [vmem:[#allocation11 + $0x10] sm:$0xff]
    %v172 = vld [vmem:[#allocation11 + $0x18] sm:$0xff]
    %v173 = vld [vmem:[#allocation11 + $0x20] sm:$0xff]
    %v174 = vld [vmem:[#allocation11 + $0x28] sm:$0xff]
    %v175 = vld [vmem:[#allocation11 + $0x30] sm:$0xff]
    %v176 = vld [vmem:[#allocation11 + $0x38] sm:$0xff]
    %v177 = vld [vmem:[#allocation11 + $0x40] sm:$0xff]
    %v178 = vld [vmem:[#allocation11 + $0x48] sm:$0xff]
    %v179 = vld [vmem:[#allocation11 + $0x50] sm:$0xff]
    %v180 = vld [vmem:[#allocation11 + $0x58] sm:$0xff]
    %v181 = vld [vmem:[#allocation11 + $0x60] sm:$0xff]
    %v182 = vld [vmem:[#allocation11 + $0x68] sm:$0xff]
    %v183 = vld [vmem:[#allocation11 + $0x70] sm:$0xff]
    %v184 = vld [vmem:[#allocation11 + $0x78] sm:$0xff]
    %v186 = vlaneseq
    %v187 = vshrl.u32 %v186, 7
    %v188 = vsub.s32 0, %v187
    %v189 = vrot.slane %v167, %v188
    %191 = vmatprep.subr.mxu0 0.0
    %192 = vmatpush1.msra.mxu0 %v169
    %193 = vmatprep.subr.mxu0 0.0
    %194 = vmatpush1.msra.mxu0 %v170
    %195 = vmatprep.subr.mxu0 0.0
    %196 = vmatpush1.msra.mxu0 %v171
    %197 = vmatprep.subr.mxu0 0.0
    %198 = vmatpush1.msra.mxu0 %v172
    %199 = vmatprep.subr.mxu0 0.0
    %200 = vmatpush1.msra.mxu0 %v173
    %201 = vmatprep.subr.mxu0 0.0
    %202 = vmatpush1.msra.mxu0 %v174
    %203 = vmatprep.subr.mxu0 0.0
    %204 = vmatpush1.msra.mxu0 %v175
    %205 = vmatprep.subr.mxu0 0.0
    %206 = vmatpush1.msra.mxu0 %v176
    %207 = vmatprep.subr.mxu0 0.0
    %208 = vmatpush1.msra.mxu0 %v177
    %209 = vmatprep.subr.mxu0 0.0
    %210 = vmatpush1.msra.mxu0 %v178
    %211 = vmatprep.subr.mxu0 0.0
    %212 = vmatpush1.msra.mxu0 %v179
    %213 = vmatprep.subr.mxu0 0.0
    %214 = vmatpush1.msra.mxu0 %v180
    %215 = vmatprep.subr.mxu0 0.0
    %216 = vmatpush1.msra.mxu0 %v181
    %217 = vmatprep.subr.mxu0 0.0
    %218 = vmatpush1.msra.mxu0 %v182
    %219 = vmatprep.subr.mxu0 0.0
    %220 = vmatpush1.msra.mxu0 %v183
    %221 = vmatprep.subr.mxu0 0.0
    %222 = vmatpush1.msra.mxu0 %v184
    %223 = vmatprep.subr.mxu0 0.0
    %224 = vmatpush1.msra.mxu0 0.0
    %225 = vmatprep.subr.mxu0 0.0
    %226 = vmatpush1.msra.mxu0 0.0
    %227 = vmatprep.subr.mxu0 0.0
    %228 = vmatpush1.msra.mxu0 0.0
    %229 = vmatprep.subr.mxu0 0.0
    %230 = vmatpush1.msra.mxu0 0.0
    %231 = vmatprep.subr.mxu0 0.0
    %232 = vmatpush1.msra.mxu0 0.0
    %233 = vmatprep.subr.mxu0 0.0
    %234 = vmatpush1.msra.mxu0 0.0
    %235 = vmatprep.subr.mxu0 0.0
    %236 = vmatpush1.msra.mxu0 0.0
    %237 = vmatprep.subr.mxu0 0.0
    %238 = vmatpush1.msra.mxu0 0.0
    %239 = vmatprep.subr.mxu0 0.0
    %240 = vmatpush1.msra.mxu0 0.0
    %241 = vmatprep.subr.mxu0 0.0
    %242 = vmatpush1.msra.mxu0 0.0
    %243 = vmatprep.subr.mxu0 0.0
    %244 = vmatpush1.msra.mxu0 0.0
    %245 = vmatprep.subr.mxu0 0.0
    %246 = vmatpush1.msra.mxu0 0.0
    %247 = vmatprep.subr.mxu0 0.0
    %248 = vmatpush1.msra.mxu0 0.0
    %249 = vmatprep.subr.mxu0 0.0
    %250 = vmatpush1.msra.mxu0 0.0
    %251 = vmatprep.subr.mxu0 0.0
    %252 = vmatpush1.msra.mxu0 0.0
    %253 = vmatprep.subr.mxu0 0.0
    %254 = vmatpush1.msra.mxu0 0.0
    %255 = vmatprep.mubr.f32.mxu0 0.0
    %256 = vmatmul.mubr.f32.gmra.mrb[0].mxu0 %v148
    %v257 = vpop.f32.mrb[0].mxu0
    %v258 = vadd.f32 %v189, %v257
    %v259 = vpop.f32.mrb[0].mxu0
    %260 = vdwg.mxu0
    %v262 = vcombine.high %v258, %v258
    %v264 = vunpack.c.l.s4 1966171168
    %v265 = vunpack.c.0.s8 %v264
    %v266 = vlaneseq
    %v267 = vshrl.u32 %v266, 7
    %v268 = vsub.s32 %v265, %v267
    %v269 = vrot.slane %v258, %v268
    %v271 = vunpack.c.l.s4 1966171168
    %v272 = vunpack.c.0.s8 %v271
    %v273 = vlaneseq
    %v274 = vshrl.u32 %v273, 7
    %v275 = vsub.s32 %v272, %v274
    %v276 = vrot.slane %v262, %v275
    %v277 = vcombine.high %v269, %v269
    %v278 = vcombine.high %v276, %v276
    %v280 = vunpack.c.l.s4 1966171168
    %v281 = vunpack.c.0.s8 %v280
    %v282 = vlaneseq
    %v283 = vshrl.u32 %v282, 7
    %v284 = vsub.s32 %v281, %v283
    %v285 = vrot.slane %v269, %v284
    %v287 = vunpack.c.l.s4 1966171168
    %v288 = vunpack.c.0.s8 %v287
    %v289 = vlaneseq
    %v290 = vshrl.u32 %v289, 7
    %v291 = vsub.s32 %v288, %v290
    %v292 = vrot.slane %v276, %v291
    %v294 = vunpack.c.l.s4 1966171168
    %v295 = vunpack.c.0.s8 %v294
    %v296 = vlaneseq
    %v297 = vshrl.u32 %v296, 7
    %v298 = vsub.s32 %v295, %v297
    %v299 = vrot.slane %v277, %v298
    %v301 = vunpack.c.l.s4 1966171168
    %v302 = vunpack.c.0.s8 %v301
    %v303 = vlaneseq
    %v304 = vshrl.u32 %v303, 7
    %v305 = vsub.s32 %v302, %v304
    %v306 = vrot.slane %v278, %v305
    %v307 = vcombine.high %v285, %v285
    %v308 = vcombine.high %v292, %v292
    %v309 = vcombine.high %v299, %v299
    %v310 = vcombine.high %v306, %v306
    %v311 = vlaneseq
    %v312 = vshrl.u32 %v311, 7
    %v313 = vsub.s32 0, %v312
    %v314 = vrot.slane %v285, %v313
    %v315 = vlaneseq
    %v316 = vshrl.u32 %v315, 7
    %v317 = vsub.s32 0, %v316
    %v318 = vrot.slane %v299, %v317
    %v319 = vlaneseq
    %v320 = vshrl.u32 %v319, 7
    %v321 = vsub.s32 0, %v320
    %v322 = vrot.slane %v307, %v321
    %v323 = vlaneseq
    %v324 = vshrl.u32 %v323, 7
    %v325 = vsub.s32 0, %v324
    %v326 = vrot.slane %v309, %v325
    %v327 = vlaneseq
    %v328 = vshrl.u32 %v327, 7
    %v329 = vsub.s32 0, %v328
    %v330 = vrot.slane %v292, %v329
    %v331 = vlaneseq
    %v332 = vshrl.u32 %v331, 7
    %v333 = vsub.s32 0, %v332
    %v334 = vrot.slane %v306, %v333
    %v335 = vlaneseq
    %v336 = vshrl.u32 %v335, 7
    %v337 = vsub.s32 0, %v336
    %v338 = vrot.slane %v308, %v337
    %v339 = vlaneseq
    %v340 = vshrl.u32 %v339, 7
    %v341 = vsub.s32 0, %v340
    %v342 = vrot.slane %v310, %v341
    %v351 = vadd.f32 %v314, %v158
    %v352 = vadd.f32 %v318, %v159
    %v353 = vadd.f32 %v322, %v160
    %v354 = vadd.f32 %v326, %v161
    %v355 = vadd.f32 %v330, %v162
    %v356 = vadd.f32 %v334, %v163
    %v357 = vadd.f32 %v338, %v164
    %v358 = vadd.f32 %v342, %v165
    %v359 = vtanh.pop %v351
    %v360 = vtanh.pop %v352
    %v361 = vtanh.pop %v353
    %v362 = vtanh.pop %v354
    %v363 = vtanh.pop %v355
    %v364 = vtanh.pop %v356
    %v365 = vtanh.pop %v357
    %v366 = vtanh.pop %v358
    %v367 = vld [vmem:[#allocation13] sm:$0x1]
    %v369 = vlaneseq
    %v370 = vshrl.u32 %v369, 7
    %v371 = vsub.s32 0, %v370
    %v372 = vrot.slane %v367, %v371
    %v374 = vmul.f32 %v359, %v372
    %v375 = vmul.f32 %v360, %v372
    %v376 = vmul.f32 %v361, %v372
    %v377 = vmul.f32 %v362, %v372
    %v378 = vmul.f32 %v363, %v372
    %v379 = vmul.f32 %v364, %v372
    %v380 = vmul.f32 %v365, %v372
    %v381 = vmul.f32 %v366, %v372
    %382 = vadd.xlane.f32.xlu0 %v374
    %v383 = vpop.xlane.xlu0 %382
    %384 = vadd.xlane.f32.xlu0 %v375
    %v385 = vpop.xlane.xlu0 %384
    %386 = vadd.xlane.f32.xlu0 %v376
    %v387 = vpop.xlane.xlu0 %386
    %388 = vadd.xlane.f32.xlu0 %v377
    %v389 = vpop.xlane.xlu0 %388
    %390 = vadd.xlane.f32.xlu0 %v378
    %v391 = vpop.xlane.xlu0 %390
    %392 = vadd.xlane.f32.xlu0 %v379
    %v393 = vpop.xlane.xlu0 %392
    %394 = vadd.xlane.f32.xlu0 %v380
    %v395 = vpop.xlane.xlu0 %394
    %396 = vadd.xlane.f32.xlu0 %v381
    %v397 = vpop.xlane.xlu0 %396
    %v406 = vlaneseq
    %v407 = vand.u32 %v406, 127
    %v408 = vlaneseq
    %v409 = vshrl.u32 %v408, 7
    %v410 = vsub.s32 %v407, %v409
    %v411 = vrot.slane %v383, %v410
    %v412 = vlaneseq
    %v413 = vshrl.u32 %v412, 7
    %v414 = vsub.s32 %v407, %v413
    %v415 = vrot.slane %v385, %v414
    %v416 = vlaneseq
    %v417 = vshrl.u32 %v416, 7
    %v418 = vsub.s32 %v407, %v417
    %v419 = vrot.slane %v387, %v418
    %v420 = vlaneseq
    %v421 = vshrl.u32 %v420, 7
    %v422 = vsub.s32 %v407, %v421
    %v423 = vrot.slane %v389, %v422
    %v424 = vlaneseq
    %v425 = vshrl.u32 %v424, 7
    %v426 = vsub.s32 %v407, %v425
    %v427 = vrot.slane %v391, %v426
    %v428 = vlaneseq
    %v429 = vshrl.u32 %v428, 7
    %v430 = vsub.s32 %v407, %v429
    %v431 = vrot.slane %v393, %v430
    %v432 = vlaneseq
    %v433 = vshrl.u32 %v432, 7
    %v434 = vsub.s32 %v407, %v433
    %v435 = vrot.slane %v395, %v434
    %v436 = vlaneseq
    %v437 = vshrl.u32 %v436, 7
    %v438 = vsub.s32 %v407, %v437
    %v439 = vrot.slane %v397, %v438
    %vm440 = vcmask 1041409
    %v441 = vsel %vm440, %v415, %v411
    %vm442 = vcmask 1042434
    %v443 = vsel %vm442, %v419, %v441
    %vm444 = vcmask 1043459
    %v445 = vsel %vm444, %v423, %v443
    %vm446 = vcmask 1044484
    %v447 = vsel %vm446, %v427, %v445
    %vm448 = vcmask 1045509
    %v449 = vsel %vm448, %v431, %v447
    %vm450 = vcmask 1046534
    %v451 = vsel %vm450, %v435, %v449
    %vm452 = vcmask 1047559
    %v453 = vsel %vm452, %v439, %v451
    %vm455 = vcmask 64512
    %v456 = vsel %vm455, %v453, -inf
    %457 = vmax.xlane.f32.xlu0 %v456
    %v458 = vpop.xlane.xlu0 %457
    %v460 = vlaneseq
    %v461 = vshrl.u32 %v460, 7
    %v462 = vsub.s32 0, %v461
    %v463 = vrot.slane %v458, %v462
    %v464 = vlaneseq
    %v465 = vshrl.u32 %v464, 7
    %v466 = vsub.s32 1, %v465
    %v467 = vrot.slane %v458, %v466
    %v468 = vlaneseq
    %v469 = vshrl.u32 %v468, 7
    %v470 = vsub.s32 2, %v469
    %v471 = vrot.slane %v458, %v470
    %v472 = vlaneseq
    %v473 = vshrl.u32 %v472, 7
    %v474 = vsub.s32 3, %v473
    %v475 = vrot.slane %v458, %v474
    %v476 = vlaneseq
    %v477 = vshrl.u32 %v476, 7
    %v478 = vsub.s32 4, %v477
    %v479 = vrot.slane %v458, %v478
    %v480 = vlaneseq
    %v481 = vshrl.u32 %v480, 7
    %v482 = vsub.s32 5, %v481
    %v483 = vrot.slane %v458, %v482
    %v484 = vlaneseq
    %v485 = vshrl.u32 %v484, 7
    %v486 = vsub.s32 6, %v485
    %v487 = vrot.slane %v458, %v486
    %v488 = vlaneseq
    %v489 = vshrl.u32 %v488, 7
    %v490 = vsub.s32 7, %v489
    %v491 = vrot.slane %v458, %v490
    %v500 = vsub.f32 %v383, %v463
    %v501 = vsub.f32 %v385, %v467
    %v502 = vsub.f32 %v387, %v471
    %v503 = vsub.f32 %v389, %v475
    %v504 = vsub.f32 %v391, %v479
    %v505 = vsub.f32 %v393, %v483
    %v506 = vsub.f32 %v395, %v487
    %v507 = vsub.f32 %v397, %v491
    %v508 = vmul.f32 %v500, 1.442695
    %v509 = vpow.pop %v508
    %v510 = vmul.f32 %v501, 1.442695
    %v511 = vpow.pop %v510
    %v512 = vmul.f32 %v502, 1.442695
    %v513 = vpow.pop %v512
    %v514 = vmul.f32 %v503, 1.442695
    %v515 = vpow.pop %v514
    %v516 = vmul.f32 %v504, 1.442695
    %v517 = vpow.pop %v516
    %v518 = vmul.f32 %v505, 1.442695
    %v519 = vpow.pop %v518
    %v520 = vmul.f32 %v506, 1.442695
    %v521 = vpow.pop %v520
    %v522 = vmul.f32 %v507, 1.442695
    %v523 = vpow.pop %v522
    %532 = vset.pattern.permute.xlu0 0
    %533 = vperm.xlu0 %532, %v509
    %v534 = vpop.permute.xlu0 %533
    %535 = vset.pattern.permute.xlu0 0
    %536 = vperm.xlu0 %535, %v511
    %v537 = vpop.permute.xlu0 %536
    %538 = vset.pattern.permute.xlu0 0
    %539 = vperm.xlu0 %538, %v513
    %v540 = vpop.permute.xlu0 %539
    %541 = vset.pattern.permute.xlu0 0
    %542 = vperm.xlu0 %541, %v515
    %v543 = vpop.permute.xlu0 %542
    %544 = vset.pattern.permute.xlu0 0
    %545 = vperm.xlu0 %544, %v517
    %v546 = vpop.permute.xlu0 %545
    %547 = vset.pattern.permute.xlu0 0
    %548 = vperm.xlu0 %547, %v519
    %v549 = vpop.permute.xlu0 %548
    %550 = vset.pattern.permute.xlu0 0
    %551 = vperm.xlu0 %550, %v521
    %v552 = vpop.permute.xlu0 %551
    %553 = vset.pattern.permute.xlu0 0
    %554 = vperm.xlu0 %553, %v523
    %v555 = vpop.permute.xlu0 %554
    %v556 = vlaneseq
    %v557 = vshrl.u32 %v556, 7
    %v558 = vsub.s32 %v407, %v557
    %v559 = vrot.slane %v534, %v558
    %v560 = vlaneseq
    %v561 = vshrl.u32 %v560, 7
    %v562 = vsub.s32 %v407, %v561
    %v563 = vrot.slane %v537, %v562
    %v564 = vlaneseq
    %v565 = vshrl.u32 %v564, 7
    %v566 = vsub.s32 %v407, %v565
    %v567 = vrot.slane %v540, %v566
    %v568 = vlaneseq
    %v569 = vshrl.u32 %v568, 7
    %v570 = vsub.s32 %v407, %v569
    %v571 = vrot.slane %v543, %v570
    %v572 = vlaneseq
    %v573 = vshrl.u32 %v572, 7
    %v574 = vsub.s32 %v407, %v573
    %v575 = vrot.slane %v546, %v574
    %v576 = vlaneseq
    %v577 = vshrl.u32 %v576, 7
    %v578 = vsub.s32 %v407, %v577
    %v579 = vrot.slane %v549, %v578
    %v580 = vlaneseq
    %v581 = vshrl.u32 %v580, 7
    %v582 = vsub.s32 %v407, %v581
    %v583 = vrot.slane %v552, %v582
    %v584 = vlaneseq
    %v585 = vshrl.u32 %v584, 7
    %v586 = vsub.s32 %v407, %v585
    %v587 = vrot.slane %v555, %v586
    %v588 = vsel %vm440, %v563, %v559
    %v589 = vsel %vm442, %v567, %v588
    %v590 = vsel %vm444, %v571, %v589
    %v591 = vsel %vm446, %v575, %v590
    %v592 = vsel %vm448, %v579, %v591
    %v593 = vsel %vm450, %v583, %v592
    %v594 = vsel %vm452, %v587, %v593
    %v596 = vsel %vm455, %v594, 0.0
    %597 = vadd.xlane.f32.xlu0 %v596
    %v598 = vpop.xlane.xlu0 %597
    %v600 = vlaneseq
    %v601 = vshrl.u32 %v600, 7
    %v602 = vsub.s32 0, %v601
    %v603 = vrot.slane %v598, %v602
    %v604 = vlaneseq
    %v605 = vshrl.u32 %v604, 7
    %v606 = vsub.s32 1, %v605
    %v607 = vrot.slane %v598, %v606
    %v608 = vlaneseq
    %v609 = vshrl.u32 %v608, 7
    %v610 = vsub.s32 2, %v609
    %v611 = vrot.slane %v598, %v610
    %v612 = vlaneseq
    %v613 = vshrl.u32 %v612, 7
    %v614 = vsub.s32 3, %v613
    %v615 = vrot.slane %v598, %v614
    %v616 = vlaneseq
    %v617 = vshrl.u32 %v616, 7
    %v618 = vsub.s32 4, %v617
    %v619 = vrot.slane %v598, %v618
    %v620 = vlaneseq
    %v621 = vshrl.u32 %v620, 7
    %v622 = vsub.s32 5, %v621
    %v623 = vrot.slane %v598, %v622
    %v624 = vlaneseq
    %v625 = vshrl.u32 %v624, 7
    %v626 = vsub.s32 6, %v625
    %v627 = vrot.slane %v598, %v626
    %v628 = vlaneseq
    %v629 = vshrl.u32 %v628, 7
    %v630 = vsub.s32 7, %v629
    %v631 = vrot.slane %v598, %v630
    %v640 = vrcp.pop %v603
    %v641 = vmul.f32 %v509, %v640
    %v642 = vrcp.pop %v607
    %v643 = vmul.f32 %v511, %v642
    %v644 = vrcp.pop %v611
    %v645 = vmul.f32 %v513, %v644
    %v646 = vrcp.pop %v615
    %v647 = vmul.f32 %v515, %v646
    %v648 = vrcp.pop %v619
    %v649 = vmul.f32 %v517, %v648
    %v650 = vrcp.pop %v623
    %v651 = vmul.f32 %v519, %v650
    %v652 = vrcp.pop %v627
    %v653 = vmul.f32 %v521, %v652
    %v654 = vrcp.pop %v631
    %v655 = vmul.f32 %v523, %v654
    %657 = vset.pattern.permute.xlu0 0
    %658 = vperm.xlu0 %657, %v641
    %v659 = vpop.permute.xlu0 %658
    %v660 = vlaneseq
    %v661 = vshrl.u32 %v660, 7
    %v662 = vsub.s32 %v407, %v661
    %v663 = vrot.slane %v659, %v662
    %v664 = vsel %vm455, %v663, 0
    %666 = vmatprep.subr.mxu0 0.0
    %667 = vmatpush1.msra.mxu0 %v150
    %668 = vmatprep.subr.mxu0 0.0
    %669 = vmatpush1.msra.mxu0 0.0
    %670 = vmatprep.subr.mxu0 0.0
    %671 = vmatpush1.msra.mxu0 0.0
    %672 = vmatprep.subr.mxu0 0.0
    %673 = vmatpush1.msra.mxu0 0.0
    %674 = vmatprep.subr.mxu0 0.0
    %675 = vmatpush1.msra.mxu0 0.0
    %676 = vmatprep.subr.mxu0 0.0
    %677 = vmatpush1.msra.mxu0 0.0
    %678 = vmatprep.subr.mxu0 0.0
    %679 = vmatpush1.msra.mxu0 0.0
    %680 = vmatprep.subr.mxu0 0.0
    %681 = vmatpush1.msra.mxu0 0.0
    %682 = vmatprep.subr.mxu0 0.0
    %683 = vmatpush1.msra.mxu0 0.0
    %684 = vmatprep.subr.mxu0 0.0
    %685 = vmatpush1.msra.mxu0 0.0
    %686 = vmatprep.subr.mxu0 0.0
    %687 = vmatpush1.msra.mxu0 0.0
    %688 = vmatprep.subr.mxu0 0.0
    %689 = vmatpush1.msra.mxu0 0.0
    %690 = vmatprep.subr.mxu0 0.0
    %691 = vmatpush1.msra.mxu0 0.0
    %692 = vmatprep.subr.mxu0 0.0
    %693 = vmatpush1.msra.mxu0 0.0
    %694 = vmatprep.subr.mxu0 0.0
    %695 = vmatpush1.msra.mxu0 0.0
    %696 = vmatprep.subr.mxu0 0.0
    %697 = vmatpush1.msra.mxu0 0.0
    %698 = vmatprep.subr.mxu0 0.0
    %699 = vmatpush1.msra.mxu0 0.0
    %700 = vmatprep.subr.mxu0 0.0
    %701 = vmatpush1.msra.mxu0 0.0
    %702 = vmatprep.subr.mxu0 0.0
    %703 = vmatpush1.msra.mxu0 0.0
    %704 = vmatprep.subr.mxu0 0.0
    %705 = vmatpush1.msra.mxu0 0.0
    %706 = vmatprep.subr.mxu0 0.0
    %707 = vmatpush1.msra.mxu0 0.0
    %708 = vmatprep.subr.mxu0 0.0
    %709 = vmatpush1.msra.mxu0 0.0
    %710 = vmatprep.subr.mxu0 0.0
    %711 = vmatpush1.msra.mxu0 0.0
    %712 = vmatprep.subr.mxu0 0.0
    %713 = vmatpush1.msra.mxu0 0.0
    %714 = vmatprep.subr.mxu0 0.0
    %715 = vmatpush1.msra.mxu0 0.0
    %716 = vmatprep.subr.mxu0 0.0
    %717 = vmatpush1.msra.mxu0 0.0
    %718 = vmatprep.subr.mxu0 0.0
    %719 = vmatpush1.msra.mxu0 0.0
    %720 = vmatprep.subr.mxu0 0.0
    %721 = vmatpush1.msra.mxu0 0.0
    %722 = vmatprep.subr.mxu0 0.0
    %723 = vmatpush1.msra.mxu0 0.0
    %724 = vmatprep.subr.mxu0 0.0
    %725 = vmatpush1.msra.mxu0 0.0
    %726 = vmatprep.subr.mxu0 0.0
    %727 = vmatpush1.msra.mxu0 0.0
    %728 = vmatprep.subr.mxu0 0.0
    %729 = vmatpush1.msra.mxu0 0.0
    %730 = vmatprep.mubr.f32.mxu0 0.0
    %731 = vmatmul.mubr.f32.gmra.mrb[0].mxu0 %v664
    %v732 = vpop.f32.mrb[0].mxu0
    %v733 = vadd.f32 0.0, %v732
    %v734 = vpop.f32.mrb[0].mxu0
    %735 = vdwg.mxu0
    %737 = vset.pattern.permute.xlu0 0
    %738 = vperm.xlu0 %737, %v643
    %v739 = vpop.permute.xlu0 %738
    %v740 = vlaneseq
    %v741 = vshrl.u32 %v740, 7
    %v742 = vsub.s32 %v407, %v741
    %v743 = vrot.slane %v739, %v742
    %v744 = vsel %vm455, %v743, 0
    %746 = vmatprep.subr.mxu0 0.0
    %747 = vmatpush1.msra.mxu0 %v151
    %748 = vmatprep.subr.mxu0 0.0
    %749 = vmatpush1.msra.mxu0 0.0
    %750 = vmatprep.subr.mxu0 0.0
    %751 = vmatpush1.msra.mxu0 0.0
    %752 = vmatprep.subr.mxu0 0.0
    %753 = vmatpush1.msra.mxu0 0.0
    %754 = vmatprep.subr.mxu0 0.0
    %755 = vmatpush1.msra.mxu0 0.0
    %756 = vmatprep.subr.mxu0 0.0
    %757 = vmatpush1.msra.mxu0 0.0
    %758 = vmatprep.subr.mxu0 0.0
    %759 = vmatpush1.msra.mxu0 0.0
    %760 = vmatprep.subr.mxu0 0.0
    %761 = vmatpush1.msra.mxu0 0.0
    %762 = vmatprep.subr.mxu0 0.0
    %763 = vmatpush1.msra.mxu0 0.0
    %764 = vmatprep.subr.mxu0 0.0
    %765 = vmatpush1.msra.mxu0 0.0
    %766 = vmatprep.subr.mxu0 0.0
    %767 = vmatpush1.msra.mxu0 0.0
    %768 = vmatprep.subr.mxu0 0.0
    %769 = vmatpush1.msra.mxu0 0.0
    %770 = vmatprep.subr.mxu0 0.0
    %771 = vmatpush1.msra.mxu0 0.0
    %772 = vmatprep.subr.mxu0 0.0
    %773 = vmatpush1.msra.mxu0 0.0
    %774 = vmatprep.subr.mxu0 0.0
    %775 = vmatpush1.msra.mxu0 0.0
    %776 = vmatprep.subr.mxu0 0.0
    %777 = vmatpush1.msra.mxu0 0.0
    %778 = vmatprep.subr.mxu0 0.0
    %779 = vmatpush1.msra.mxu0 0.0
    %780 = vmatprep.subr.mxu0 0.0
    %781 = vmatpush1.msra.mxu0 0.0
    %782 = vmatprep.subr.mxu0 0.0
    %783 = vmatpush1.msra.mxu0 0.0
    %784 = vmatprep.subr.mxu0 0.0
    %785 = vmatpush1.msra.mxu0 0.0
    %786 = vmatprep.subr.mxu0 0.0
    %787 = vmatpush1.msra.mxu0 0.0
    %788 = vmatprep.subr.mxu0 0.0
    %789 = vmatpush1.msra.mxu0 0.0
    %790 = vmatprep.subr.mxu0 0.0
    %791 = vmatpush1.msra.mxu0 0.0
    %792 = vmatprep.subr.mxu0 0.0
    %793 = vmatpush1.msra.mxu0 0.0
    %794 = vmatprep.subr.mxu0 0.0
    %795 = vmatpush1.msra.mxu0 0.0
    %796 = vmatprep.subr.mxu0 0.0
    %797 = vmatpush1.msra.mxu0 0.0
    %798 = vmatprep.subr.mxu0 0.0
    %799 = vmatpush1.msra.mxu0 0.0
    %800 = vmatprep.subr.mxu0 0.0
    %801 = vmatpush1.msra.mxu0 0.0
    %802 = vmatprep.subr.mxu0 0.0
    %803 = vmatpush1.msra.mxu0 0.0
    %804 = vmatprep.subr.mxu0 0.0
    %805 = vmatpush1.msra.mxu0 0.0
    %806 = vmatprep.subr.mxu0 0.0
    %807 = vmatpush1.msra.mxu0 0.0
    %808 = vmatprep.subr.mxu0 0.0
    %809 = vmatpush1.msra.mxu0 0.0
    %810 = vmatprep.mubr.f32.mxu0 0.0
    %811 = vmatmul.mubr.f32.gmra.mrb[0].mxu0 %v744
    %v812 = vpop.f32.mrb[0].mxu0
    %v813 = vadd.f32 0.0, %v812
    %v814 = vpop.f32.mrb[0].mxu0
    %815 = vdwg.mxu0
    %817 = vset.pattern.permute.xlu0 0
    %818 = vperm.xlu0 %817, %v645
    %v819 = vpop.permute.xlu0 %818
    %v820 = vlaneseq
    %v821 = vshrl.u32 %v820, 7
    %v822 = vsub.s32 %v407, %v821
    %v823 = vrot.slane %v819, %v822
    %v824 = vsel %vm455, %v823, 0
    %826 = vmatprep.subr.mxu0 0.0
    %827 = vmatpush1.msra.mxu0 %v152
    %828 = vmatprep.subr.mxu0 0.0
    %829 = vmatpush1.msra.mxu0 0.0
    %830 = vmatprep.subr.mxu0 0.0
    %831 = vmatpush1.msra.mxu0 0.0
    %832 = vmatprep.subr.mxu0 0.0
    %833 = vmatpush1.msra.mxu0 0.0
    %834 = vmatprep.subr.mxu0 0.0
    %835 = vmatpush1.msra.mxu0 0.0
    %836 = vmatprep.subr.mxu0 0.0
    %837 = vmatpush1.msra.mxu0 0.0
    %838 = vmatprep.subr.mxu0 0.0
    %839 = vmatpush1.msra.mxu0 0.0
    %840 = vmatprep.subr.mxu0 0.0
    %841 = vmatpush1.msra.mxu0 0.0
    %842 = vmatprep.subr.mxu0 0.0
    %843 = vmatpush1.msra.mxu0 0.0
    %844 = vmatprep.subr.mxu0 0.0
    %845 = vmatpush1.msra.mxu0 0.0
    %846 = vmatprep.subr.mxu0 0.0
    %847 = vmatpush1.msra.mxu0 0.0
    %848 = vmatprep.subr.mxu0 0.0
    %849 = vmatpush1.msra.mxu0 0.0
    %850 = vmatprep.subr.mxu0 0.0
    %851 = vmatpush1.msra.mxu0 0.0
    %852 = vmatprep.subr.mxu0 0.0
    %853 = vmatpush1.msra.mxu0 0.0
    %854 = vmatprep.subr.mxu0 0.0
    %855 = vmatpush1.msra.mxu0 0.0
    %856 = vmatprep.subr.mxu0 0.0
    %857 = vmatpush1.msra.mxu0 0.0
    %858 = vmatprep.subr.mxu0 0.0
    %859 = vmatpush1.msra.mxu0 0.0
    %860 = vmatprep.subr.mxu0 0.0
    %861 = vmatpush1.msra.mxu0 0.0
    %862 = vmatprep.subr.mxu0 0.0
    %863 = vmatpush1.msra.mxu0 0.0
    %864 = vmatprep.subr.mxu0 0.0
    %865 = vmatpush1.msra.mxu0 0.0
    %866 = vmatprep.subr.mxu0 0.0
    %867 = vmatpush1.msra.mxu0 0.0
    %868 = vmatprep.subr.mxu0 0.0
    %869 = vmatpush1.msra.mxu0 0.0
    %870 = vmatprep.subr.mxu0 0.0
    %871 = vmatpush1.msra.mxu0 0.0
    %872 = vmatprep.subr.mxu0 0.0
    %873 = vmatpush1.msra.mxu0 0.0
    %874 = vmatprep.subr.mxu0 0.0
    %875 = vmatpush1.msra.mxu0 0.0
    %876 = vmatprep.subr.mxu0 0.0
    %877 = vmatpush1.msra.mxu0 0.0
    %878 = vmatprep.subr.mxu0 0.0
    %879 = vmatpush1.msra.mxu0 0.0
    %880 = vmatprep.subr.mxu0 0.0
    %881 = vmatpush1.msra.mxu0 0.0
    %882 = vmatprep.subr.mxu0 0.0
    %883 = vmatpush1.msra.mxu0 0.0
    %884 = vmatprep.subr.mxu0 0.0
    %885 = vmatpush1.msra.mxu0 0.0
    %886 = vmatprep.subr.mxu0 0.0
    %887 = vmatpush1.msra.mxu0 0.0
    %888 = vmatprep.subr.mxu0 0.0
    %889 = vmatpush1.msra.mxu0 0.0
    %890 = vmatprep.mubr.f32.mxu0 0.0
    %891 = vmatmul.mubr.f32.gmra.mrb[0].mxu0 %v824
    %v892 = vpop.f32.mrb[0].mxu0
    %v893 = vadd.f32 0.0, %v892
    %v894 = vpop.f32.mrb[0].mxu0
    %895 = vdwg.mxu0
    %897 = vset.pattern.permute.xlu0 0
    %898 = vperm.xlu0 %897, %v647
    %v899 = vpop.permute.xlu0 %898
    %v900 = vlaneseq
    %v901 = vshrl.u32 %v900, 7
    %v902 = vsub.s32 %v407, %v901
    %v903 = vrot.slane %v899, %v902
    %v904 = vsel %vm455, %v903, 0
    %906 = vmatprep.subr.mxu0 0.0
    %907 = vmatpush1.msra.mxu0 %v153
    %908 = vmatprep.subr.mxu0 0.0
    %909 = vmatpush1.msra.mxu0 0.0
    %910 = vmatprep.subr.mxu0 0.0
    %911 = vmatpush1.msra.mxu0 0.0
    %912 = vmatprep.subr.mxu0 0.0
    %913 = vmatpush1.msra.mxu0 0.0
    %914 = vmatprep.subr.mxu0 0.0
    %915 = vmatpush1.msra.mxu0 0.0
    %916 = vmatprep.subr.mxu0 0.0
    %917 = vmatpush1.msra.mxu0 0.0
    %918 = vmatprep.subr.mxu0 0.0
    %919 = vmatpush1.msra.mxu0 0.0
    %920 = vmatprep.subr.mxu0 0.0
    %921 = vmatpush1.msra.mxu0 0.0
    %922 = vmatprep.subr.mxu0 0.0
    %923 = vmatpush1.msra.mxu0 0.0
    %924 = vmatprep.subr.mxu0 0.0
    %925 = vmatpush1.msra.mxu0 0.0
    %926 = vmatprep.subr.mxu0 0.0
    %927 = vmatpush1.msra.mxu0 0.0
    %928 = vmatprep.subr.mxu0 0.0
    %929 = vmatpush1.msra.mxu0 0.0
    %930 = vmatprep.subr.mxu0 0.0
    %931 = vmatpush1.msra.mxu0 0.0
    %932 = vmatprep.subr.mxu0 0.0
    %933 = vmatpush1.msra.mxu0 0.0
    %934 = vmatprep.subr.mxu0 0.0
    %935 = vmatpush1.msra.mxu0 0.0
    %936 = vmatprep.subr.mxu0 0.0
    %937 = vmatpush1.msra.mxu0 0.0
    %938 = vmatprep.subr.mxu0 0.0
    %939 = vmatpush1.msra.mxu0 0.0
    %940 = vmatprep.subr.mxu0 0.0
    %941 = vmatpush1.msra.mxu0 0.0
    %942 = vmatprep.subr.mxu0 0.0
    %943 = vmatpush1.msra.mxu0 0.0
    %944 = vmatprep.subr.mxu0 0.0
    %945 = vmatpush1.msra.mxu0 0.0
    %946 = vmatprep.subr.mxu0 0.0
    %947 = vmatpush1.msra.mxu0 0.0
    %948 = vmatprep.subr.mxu0 0.0
    %949 = vmatpush1.msra.mxu0 0.0
    %950 = vmatprep.subr.mxu0 0.0
    %951 = vmatpush1.msra.mxu0 0.0
    %952 = vmatprep.subr.mxu0 0.0
    %953 = vmatpush1.msra.mxu0 0.0
    %954 = vmatprep.subr.mxu0 0.0
    %955 = vmatpush1.msra.mxu0 0.0
    %956 = vmatprep.subr.mxu0 0.0
    %957 = vmatpush1.msra.mxu0 0.0
    %958 = vmatprep.subr.mxu0 0.0
    %959 = vmatpush1.msra.mxu0 0.0
    %960 = vmatprep.subr.mxu0 0.0
    %961 = vmatpush1.msra.mxu0 0.0
    %962 = vmatprep.subr.mxu0 0.0
    %963 = vmatpush1.msra.mxu0 0.0
    %964 = vmatprep.subr.mxu0 0.0
    %965 = vmatpush1.msra.mxu0 0.0
    %966 = vmatprep.subr.mxu0 0.0
    %967 = vmatpush1.msra.mxu0 0.0
    %968 = vmatprep.subr.mxu0 0.0
    %969 = vmatpush1.msra.mxu0 0.0
    %970 = vmatprep.mubr.f32.mxu0 0.0
    %971 = vmatmul.mubr.f32.gmra.mrb[0].mxu0 %v904
    %v972 = vpop.f32.mrb[0].mxu0
    %v973 = vadd.f32 0.0, %v972
    %v974 = vpop.f32.mrb[0].mxu0
    %975 = vdwg.mxu0
    %977 = vset.pattern.permute.xlu0 0
    %978 = vperm.xlu0 %977, %v649
    %v979 = vpop.permute.xlu0 %978
    %v980 = vlaneseq
    %v981 = vshrl.u32 %v980, 7
    %v982 = vsub.s32 %v407, %v981
    %v983 = vrot.slane %v979, %v982
    %v984 = vsel %vm455, %v983, 0
    %986 = vmatprep.subr.mxu0 0.0
    %987 = vmatpush1.msra.mxu0 %v154
    %988 = vmatprep.subr.mxu0 0.0
    %989 = vmatpush1.msra.mxu0 0.0
    %990 = vmatprep.subr.mxu0 0.0
    %991 = vmatpush1.msra.mxu0 0.0
    %992 = vmatprep.subr.mxu0 0.0
    %993 = vmatpush1.msra.mxu0 0.0
    %994 = vmatprep.subr.mxu0 0.0
    %995 = vmatpush1.msra.mxu0 0.0
    %996 = vmatprep.subr.mxu0 0.0
    %997 = vmatpush1.msra.mxu0 0.0
    %998 = vmatprep.subr.mxu0 0.0
    %999 = vmatpush1.msra.mxu0 0.0
    %1000 = vmatprep.subr.mxu0 0.0
    %1001 = vmatpush1.msra.mxu0 0.0
    %1002 = vmatprep.subr.mxu0 0.0
    %1003 = vmatpush1.msra.mxu0 0.0
    %1004 = vmatprep.subr.mxu0 0.0
    %1005 = vmatpush1.msra.mxu0 0.0
    %1006 = vmatprep.subr.mxu0 0.0
    %1007 = vmatpush1.msra.mxu0 0.0
    %1008 = vmatprep.subr.mxu0 0.0
    %1009 = vmatpush1.msra.mxu0 0.0
    %1010 = vmatprep.subr.mxu0 0.0
    %1011 = vmatpush1.msra.mxu0 0.0
    %1012 = vmatprep.subr.mxu0 0.0
    %1013 = vmatpush1.msra.mxu0 0.0
    %1014 = vmatprep.subr.mxu0 0.0
    %1015 = vmatpush1.msra.mxu0 0.0
    %1016 = vmatprep.subr.mxu0 0.0
    %1017 = vmatpush1.msra.mxu0 0.0
    %1018 = vmatprep.subr.mxu0 0.0
    %1019 = vmatpush1.msra.mxu0 0.0
    %1020 = vmatprep.subr.mxu0 0.0
    %1021 = vmatpush1.msra.mxu0 0.0
    %1022 = vmatprep.subr.mxu0 0.0
    %1023 = vmatpush1.msra.mxu0 0.0
    %1024 = vmatprep.subr.mxu0 0.0
    %1025 = vmatpush1.msra.mxu0 0.0
    %1026 = vmatprep.subr.mxu0 0.0
    %1027 = vmatpush1.msra.mxu0 0.0
    %1028 = vmatprep.subr.mxu0 0.0
    %1029 = vmatpush1.msra.mxu0 0.0
    %1030 = vmatprep.subr.mxu0 0.0
    %1031 = vmatpush1.msra.mxu0 0.0
    %1032 = vmatprep.subr.mxu0 0.0
    %1033 = vmatpush1.msra.mxu0 0.0
    %1034 = vmatprep.subr.mxu0 0.0
    %1035 = vmatpush1.msra.mxu0 0.0
    %1036 = vmatprep.subr.mxu0 0.0
    %1037 = vmatpush1.msra.mxu0 0.0
    %1038 = vmatprep.subr.mxu0 0.0
    %1039 = vmatpush1.msra.mxu0 0.0
    %1040 = vmatprep.subr.mxu0 0.0
    %1041 = vmatpush1.msra.mxu0 0.0
    %1042 = vmatprep.subr.mxu0 0.0
    %1043 = vmatpush1.msra.mxu0 0.0
    %1044 = vmatprep.subr.mxu0 0.0
    %1045 = vmatpush1.msra.mxu0 0.0
    %1046 = vmatprep.subr.mxu0 0.0
    %1047 = vmatpush1.msra.mxu0 0.0
    %1048 = vmatprep.subr.mxu0 0.0
    %1049 = vmatpush1.msra.mxu0 0.0
    %1050 = vmatprep.mubr.f32.mxu0 0.0
    %1051 = vmatmul.mubr.f32.gmra.mrb[0].mxu0 %v984
    %v1052 = vpop.f32.mrb[0].mxu0
    %v1053 = vadd.f32 0.0, %v1052
    %v1054 = vpop.f32.mrb[0].mxu0
    %1055 = vdwg.mxu0
    %1057 = vset.pattern.permute.xlu0 0
    %1058 = vperm.xlu0 %1057, %v651
    %v1059 = vpop.permute.xlu0 %1058
    %v1060 = vlaneseq
    %v1061 = vshrl.u32 %v1060, 7
    %v1062 = vsub.s32 %v407, %v1061
    %v1063 = vrot.slane %v1059, %v1062
    %v1064 = vsel %vm455, %v1063, 0
    %1066 = vmatprep.subr.mxu0 0.0
    %1067 = vmatpush1.msra.mxu0 %v155
    %1068 = vmatprep.subr.mxu0 0.0
    %1069 = vmatpush1.msra.mxu0 0.0
    %1070 = vmatprep.subr.mxu0 0.0
    %1071 = vmatpush1.msra.mxu0 0.0
    %1072 = vmatprep.subr.mxu0 0.0
    %1073 = vmatpush1.msra.mxu0 0.0
    %1074 = vmatprep.subr.mxu0 0.0
    %1075 = vmatpush1.msra.mxu0 0.0
    %1076 = vmatprep.subr.mxu0 0.0
    %1077 = vmatpush1.msra.mxu0 0.0
    %1078 = vmatprep.subr.mxu0 0.0
    %1079 = vmatpush1.msra.mxu0 0.0
    %1080 = vmatprep.subr.mxu0 0.0
    %1081 = vmatpush1.msra.mxu0 0.0
    %1082 = vmatprep.subr.mxu0 0.0
    %1083 = vmatpush1.msra.mxu0 0.0
    %1084 = vmatprep.subr.mxu0 0.0
    %1085 = vmatpush1.msra.mxu0 0.0
    %1086 = vmatprep.subr.mxu0 0.0
    %1087 = vmatpush1.msra.mxu0 0.0
    %1088 = vmatprep.subr.mxu0 0.0
    %1089 = vmatpush1.msra.mxu0 0.0
    %1090 = vmatprep.subr.mxu0 0.0
    %1091 = vmatpush1.msra.mxu0 0.0
    %1092 = vmatprep.subr.mxu0 0.0
    %1093 = vmatpush1.msra.mxu0 0.0
    %1094 = vmatprep.subr.mxu0 0.0
    %1095 = vmatpush1.msra.mxu0 0.0
    %1096 = vmatprep.subr.mxu0 0.0
    %1097 = vmatpush1.msra.mxu0 0.0
    %1098 = vmatprep.subr.mxu0 0.0
    %1099 = vmatpush1.msra.mxu0 0.0
    %1100 = vmatprep.subr.mxu0 0.0
    %1101 = vmatpush1.msra.mxu0 0.0
    %1102 = vmatprep.subr.mxu0 0.0
    %1103 = vmatpush1.msra.mxu0 0.0
    %1104 = vmatprep.subr.mxu0 0.0
    %1105 = vmatpush1.msra.mxu0 0.0
    %1106 = vmatprep.subr.mxu0 0.0
    %1107 = vmatpush1.msra.mxu0 0.0
    %1108 = vmatprep.subr.mxu0 0.0
    %1109 = vmatpush1.msra.mxu0 0.0
    %1110 = vmatprep.subr.mxu0 0.0
    %1111 = vmatpush1.msra.mxu0 0.0
    %1112 = vmatprep.subr.mxu0 0.0
    %1113 = vmatpush1.msra.mxu0 0.0
    %1114 = vmatprep.subr.mxu0 0.0
    %1115 = vmatpush1.msra.mxu0 0.0
    %1116 = vmatprep.subr.mxu0 0.0
    %1117 = vmatpush1.msra.mxu0 0.0
    %1118 = vmatprep.subr.mxu0 0.0
    %1119 = vmatpush1.msra.mxu0 0.0
    %1120 = vmatprep.subr.mxu0 0.0
    %1121 = vmatpush1.msra.mxu0 0.0
    %1122 = vmatprep.subr.mxu0 0.0
    %1123 = vmatpush1.msra.mxu0 0.0
    %1124 = vmatprep.subr.mxu0 0.0
    %1125 = vmatpush1.msra.mxu0 0.0
    %1126 = vmatprep.subr.mxu0 0.0
    %1127 = vmatpush1.msra.mxu0 0.0
    %1128 = vmatprep.subr.mxu0 0.0
    %1129 = vmatpush1.msra.mxu0 0.0
    %1130 = vmatprep.mubr.f32.mxu0 0.0
    %1131 = vmatmul.mubr.f32.gmra.mrb[0].mxu0 %v1064
    %v1132 = vpop.f32.mrb[0].mxu0
    %v1133 = vadd.f32 0.0, %v1132
    %v1134 = vpop.f32.mrb[0].mxu0
    %1135 = vdwg.mxu0
    %1137 = vset.pattern.permute.xlu0 0
    %1138 = vperm.xlu0 %1137, %v653
    %v1139 = vpop.permute.xlu0 %1138
    %v1140 = vlaneseq
    %v1141 = vshrl.u32 %v1140, 7
    %v1142 = vsub.s32 %v407, %v1141
    %v1143 = vrot.slane %v1139, %v1142
    %v1144 = vsel %vm455, %v1143, 0
    %1146 = vmatprep.subr.mxu0 0.0
    %1147 = vmatpush1.msra.mxu0 %v156
    %1148 = vmatprep.subr.mxu0 0.0
    %1149 = vmatpush1.msra.mxu0 0.0
    %1150 = vmatprep.subr.mxu0 0.0
    %1151 = vmatpush1.msra.mxu0 0.0
    %1152 = vmatprep.subr.mxu0 0.0
    %1153 = vmatpush1.msra.mxu0 0.0
    %1154 = vmatprep.subr.mxu0 0.0
    %1155 = vmatpush1.msra.mxu0 0.0
    %1156 = vmatprep.subr.mxu0 0.0
    %1157 = vmatpush1.msra.mxu0 0.0
    %1158 = vmatprep.subr.mxu0 0.0
    %1159 = vmatpush1.msra.mxu0 0.0
    %1160 = vmatprep.subr.mxu0 0.0
    %1161 = vmatpush1.msra.mxu0 0.0
    %1162 = vmatprep.subr.mxu0 0.0
    %1163 = vmatpush1.msra.mxu0 0.0
    %1164 = vmatprep.subr.mxu0 0.0
    %1165 = vmatpush1.msra.mxu0 0.0
    %1166 = vmatprep.subr.mxu0 0.0
    %1167 = vmatpush1.msra.mxu0 0.0
    %1168 = vmatprep.subr.mxu0 0.0
    %1169 = vmatpush1.msra.mxu0 0.0
    %1170 = vmatprep.subr.mxu0 0.0
    %1171 = vmatpush1.msra.mxu0 0.0
    %1172 = vmatprep.subr.mxu0 0.0
    %1173 = vmatpush1.msra.mxu0 0.0
    %1174 = vmatprep.subr.mxu0 0.0
    %1175 = vmatpush1.msra.mxu0 0.0
    %1176 = vmatprep.subr.mxu0 0.0
    %1177 = vmatpush1.msra.mxu0 0.0
    %1178 = vmatprep.subr.mxu0 0.0
    %1179 = vmatpush1.msra.mxu0 0.0
    %1180 = vmatprep.subr.mxu0 0.0
    %1181 = vmatpush1.msra.mxu0 0.0
    %1182 = vmatprep.subr.mxu0 0.0
    %1183 = vmatpush1.msra.mxu0 0.0
    %1184 = vmatprep.subr.mxu0 0.0
    %1185 = vmatpush1.msra.mxu0 0.0
    %1186 = vmatprep.subr.mxu0 0.0
    %1187 = vmatpush1.msra.mxu0 0.0
    %1188 = vmatprep.subr.mxu0 0.0
    %1189 = vmatpush1.msra.mxu0 0.0
    %1190 = vmatprep.subr.mxu0 0.0
    %1191 = vmatpush1.msra.mxu0 0.0
    %1192 = vmatprep.subr.mxu0 0.0
    %1193 = vmatpush1.msra.mxu0 0.0
    %1194 = vmatprep.subr.mxu0 0.0
    %1195 = vmatpush1.msra.mxu0 0.0
    %1196 = vmatprep.subr.mxu0 0.0
    %1197 = vmatpush1.msra.mxu0 0.0
    %1198 = vmatprep.subr.mxu0 0.0
    %1199 = vmatpush1.msra.mxu0 0.0
    %1200 = vmatprep.subr.mxu0 0.0
    %1201 = vmatpush1.msra.mxu0 0.0
    %1202 = vmatprep.subr.mxu0 0.0
    %1203 = vmatpush1.msra.mxu0 0.0
    %1204 = vmatprep.subr.mxu0 0.0
    %1205 = vmatpush1.msra.mxu0 0.0
    %1206 = vmatprep.subr.mxu0 0.0
    %1207 = vmatpush1.msra.mxu0 0.0
    %1208 = vmatprep.subr.mxu0 0.0
    %1209 = vmatpush1.msra.mxu0 0.0
    %1210 = vmatprep.mubr.f32.mxu0 0.0
    %1211 = vmatmul.mubr.f32.gmra.mrb[0].mxu0 %v1144
    %v1212 = vpop.f32.mrb[0].mxu0
    %v1213 = vadd.f32 0.0, %v1212
    %v1214 = vpop.f32.mrb[0].mxu0
    %1215 = vdwg.mxu0
    %1217 = vset.pattern.permute.xlu0 0
    %1218 = vperm.xlu0 %1217, %v655
    %v1219 = vpop.permute.xlu0 %1218
    %v1220 = vlaneseq
    %v1221 = vshrl.u32 %v1220, 7
    %v1222 = vsub.s32 %v407, %v1221
    %v1223 = vrot.slane %v1219, %v1222
    %v1224 = vsel %vm455, %v1223, 0
    %1226 = vmatprep.subr.mxu0 0.0
    %1227 = vmatpush1.msra.mxu0 %v157
    %1228 = vmatprep.subr.mxu0 0.0
    %1229 = vmatpush1.msra.mxu0 0.0
    %1230 = vmatprep.subr.mxu0 0.0
    %1231 = vmatpush1.msra.mxu0 0.0
    %1232 = vmatprep.subr.mxu0 0.0
    %1233 = vmatpush1.msra.mxu0 0.0
    %1234 = vmatprep.subr.mxu0 0.0
    %1235 = vmatpush1.msra.mxu0 0.0
    %1236 = vmatprep.subr.mxu0 0.0
    %1237 = vmatpush1.msra.mxu0 0.0
    %1238 = vmatprep.subr.mxu0 0.0
    %1239 = vmatpush1.msra.mxu0 0.0
    %1240 = vmatprep.subr.mxu0 0.0
    %1241 = vmatpush1.msra.mxu0 0.0
    %1242 = vmatprep.subr.mxu0 0.0
    %1243 = vmatpush1.msra.mxu0 0.0
    %1244 = vmatprep.subr.mxu0 0.0
    %1245 = vmatpush1.msra.mxu0 0.0
    %1246 = vmatprep.subr.mxu0 0.0
    %1247 = vmatpush1.msra.mxu0 0.0
    %1248 = vmatprep.subr.mxu0 0.0
    %1249 = vmatpush1.msra.mxu0 0.0
    %1250 = vmatprep.subr.mxu0 0.0
    %1251 = vmatpush1.msra.mxu0 0.0
    %1252 = vmatprep.subr.mxu0 0.0
    %1253 = vmatpush1.msra.mxu0 0.0
    %1254 = vmatprep.subr.mxu0 0.0
    %1255 = vmatpush1.msra.mxu0 0.0
    %1256 = vmatprep.subr.mxu0 0.0
    %1257 = vmatpush1.msra.mxu0 0.0
    %1258 = vmatprep.subr.mxu0 0.0
    %1259 = vmatpush1.msra.mxu0 0.0
    %1260 = vmatprep.subr.mxu0 0.0
    %1261 = vmatpush1.msra.mxu0 0.0
    %1262 = vmatprep.subr.mxu0 0.0
    %1263 = vmatpush1.msra.mxu0 0.0
    %1264 = vmatprep.subr.mxu0 0.0
    %1265 = vmatpush1.msra.mxu0 0.0
    %1266 = vmatprep.subr.mxu0 0.0
    %1267 = vmatpush1.msra.mxu0 0.0
    %1268 = vmatprep.subr.mxu0 0.0
    %1269 = vmatpush1.msra.mxu0 0.0
    %1270 = vmatprep.subr.mxu0 0.0
    %1271 = vmatpush1.msra.mxu0 0.0
    %1272 = vmatprep.subr.mxu0 0.0
    %1273 = vmatpush1.msra.mxu0 0.0
    %1274 = vmatprep.subr.mxu0 0.0
    %1275 = vmatpush1.msra.mxu0 0.0
    %1276 = vmatprep.subr.mxu0 0.0
    %1277 = vmatpush1.msra.mxu0 0.0
    %1278 = vmatprep.subr.mxu0 0.0
    %1279 = vmatpush1.msra.mxu0 0.0
    %1280 = vmatprep.subr.mxu0 0.0
    %1281 = vmatpush1.msra.mxu0 0.0
    %1282 = vmatprep.subr.mxu0 0.0
    %1283 = vmatpush1.msra.mxu0 0.0
    %1284 = vmatprep.subr.mxu0 0.0
    %1285 = vmatpush1.msra.mxu0 0.0
    %1286 = vmatprep.subr.mxu0 0.0
    %1287 = vmatpush1.msra.mxu0 0.0
    %1288 = vmatprep.subr.mxu0 0.0
    %1289 = vmatpush1.msra.mxu0 0.0
    %1290 = vmatprep.mubr.f32.mxu0 0.0
    %1291 = vmatmul.mubr.f32.gmra.mrb[0].mxu0 %v1224
    %v1292 = vpop.f32.mrb[0].mxu0
    %v1293 = vadd.f32 0.0, %v1292
    %v1294 = vpop.f32.mrb[0].mxu0
    %1295 = vdwg.mxu0
    %v1304 = vrot.slane %v813, 7
    %v1305 = vsel %vm440, %v1304, %v733
    %v1306 = vrot.slane %v893, 6
    %v1307 = vsel %vm442, %v1306, %v1305
    %v1308 = vrot.slane %v973, 5
    %v1309 = vsel %vm444, %v1308, %v1307
    %v1310 = vrot.slane %v1053, 4
    %v1311 = vsel %vm446, %v1310, %v1309
    %v1312 = vrot.slane %v1133, 3
    %v1313 = vsel %vm448, %v1312, %v1311
    %v1314 = vrot.slane %v1213, 2
    %v1315 = vsel %vm450, %v1314, %v1313
    %v1316 = vrot.slane %v1293, 1
    %v1317 = vsel %vm452, %v1316, %v1315
    %v1319 = vld [vmem:[#allocation14] sm:$0xff]
    %v1320 = vld [vmem:[#allocation14 + $0x8] sm:$0xff]
    %v1321 = vld [vmem:[#allocation14 + $0x10] sm:$0xff]
    %v1322 = vld [vmem:[#allocation14 + $0x18] sm:$0xff]
    %v1323 = vld [vmem:[#allocation14 + $0x20] sm:$0xff]
    %v1324 = vld [vmem:[#allocation14 + $0x28] sm:$0xff]
    %v1325 = vld [vmem:[#allocation14 + $0x30] sm:$0xff]
    %v1326 = vld [vmem:[#allocation14 + $0x38] sm:$0xff]
    %v1327 = vld [vmem:[#allocation14 + $0x40] sm:$0xff]
    %v1328 = vld [vmem:[#allocation14 + $0x48] sm:$0xff]
    %v1329 = vld [vmem:[#allocation14 + $0x50] sm:$0xff]
    %v1330 = vld [vmem:[#allocation14 + $0x58] sm:$0xff]
    %v1331 = vld [vmem:[#allocation14 + $0x60] sm:$0xff]
    %v1332 = vld [vmem:[#allocation14 + $0x68] sm:$0xff]
    %v1333 = vld [vmem:[#allocation14 + $0x70] sm:$0xff]
    %v1334 = vld [vmem:[#allocation14 + $0x78] sm:$0xff]
    %v1335 = vld [vmem:[#allocation14 + $0x80] sm:$0xff]
    %v1336 = vld [vmem:[#allocation14 + $0x88] sm:$0xff]
    %v1337 = vld [vmem:[#allocation14 + $0x90] sm:$0xff]
    %v1338 = vld [vmem:[#allocation14 + $0x98] sm:$0xff]
    %v1339 = vld [vmem:[#allocation14 + $0xa0] sm:$0xff]
    %v1340 = vld [vmem:[#allocation14 + $0xa8] sm:$0xff]
    %v1341 = vld [vmem:[#allocation14 + $0xb0] sm:$0xff]
    %v1342 = vld [vmem:[#allocation14 + $0xb8] sm:$0xff]
    %v1343 = vld [vmem:[#allocation14 + $0xc0] sm:$0xff]
    %v1344 = vld [vmem:[#allocation14 + $0xc8] sm:$0xff]
    %v1345 = vld [vmem:[#allocation14 + $0xd0] sm:$0xff]
    %v1346 = vld [vmem:[#allocation14 + $0xd8] sm:$0xff]
    %v1347 = vld [vmem:[#allocation14 + $0xe0] sm:$0xff]
    %v1348 = vld [vmem:[#allocation14 + $0xe8] sm:$0xff]
    %v1349 = vld [vmem:[#allocation14 + $0xf0] sm:$0xff]
    %v1350 = vld [vmem:[#allocation14 + $0xf8] sm:$0xff]
    %v1351 = vld [vmem:[#allocation14 + $0x100] sm:$0xff]
    %v1352 = vld [vmem:[#allocation14 + $0x108] sm:$0xff]
    %v1353 = vld [vmem:[#allocation14 + $0x110] sm:$0xff]
    %v1354 = vld [vmem:[#allocation14 + $0x118] sm:$0xff]
    %v1355 = vld [vmem:[#allocation14 + $0x120] sm:$0xff]
    %v1356 = vld [vmem:[#allocation14 + $0x128] sm:$0xff]
    %v1357 = vld [vmem:[#allocation14 + $0x130] sm:$0xff]
    %v1358 = vld [vmem:[#allocation14 + $0x138] sm:$0xff]
    %v1359 = vld [vmem:[#allocation14 + $0x140] sm:$0xff]
    %v1360 = vld [vmem:[#allocation14 + $0x148] sm:$0xff]
    %v1361 = vld [vmem:[#allocation14 + $0x150] sm:$0xff]
    %v1362 = vld [vmem:[#allocation14 + $0x158] sm:$0xff]
    %v1363 = vld [vmem:[#allocation14 + $0x160] sm:$0xff]
    %v1364 = vld [vmem:[#allocation14 + $0x168] sm:$0xff]
    %v1365 = vld [vmem:[#allocation14 + $0x170] sm:$0xff]
    %v1366 = vld [vmem:[#allocation14 + $0x178] sm:$0xff]
    %v1367 = vld [vmem:[#allocation14 + $0x180] sm:$0xff]
    %v1368 = vld [vmem:[#allocation14 + $0x188] sm:$0xff]
    %v1369 = vld [vmem:[#allocation14 + $0x190] sm:$0xff]
    %v1370 = vld [vmem:[#allocation14 + $0x198] sm:$0xff]
    %v1371 = vld [vmem:[#allocation14 + $0x1a0] sm:$0xff]
    %v1372 = vld [vmem:[#allocation14 + $0x1a8] sm:$0xff]
    %v1373 = vld [vmem:[#allocation14 + $0x1b0] sm:$0xff]
    %v1374 = vld [vmem:[#allocation14 + $0x1b8] sm:$0xff]
    %v1375 = vld [vmem:[#allocation14 + $0x1c0] sm:$0xff]
    %v1376 = vld [vmem:[#allocation14 + $0x1c8] sm:$0xff]
    %v1377 = vld [vmem:[#allocation14 + $0x1d0] sm:$0xff]
    %v1378 = vld [vmem:[#allocation14 + $0x1d8] sm:$0xff]
    %v1379 = vld [vmem:[#allocation14 + $0x1e0] sm:$0xff]
    %v1380 = vld [vmem:[#allocation14 + $0x1e8] sm:$0xff]
    %v1381 = vld [vmem:[#allocation14 + $0x1f0] sm:$0xff]
    %v1382 = vld [vmem:[#allocation14 + $0x1f8] sm:$0xff]
    %v1383 = vld [vmem:[#allocation14 + $0x200] sm:$0xff]
    %v1384 = vld [vmem:[#allocation14 + $0x208] sm:$0xff]
    %v1385 = vld [vmem:[#allocation14 + $0x210] sm:$0xff]
    %v1386 = vld [vmem:[#allocation14 + $0x218] sm:$0xff]
    %v1387 = vld [vmem:[#allocation14 + $0x220] sm:$0xff]
    %v1388 = vld [vmem:[#allocation14 + $0x228] sm:$0xff]
    %v1389 = vld [vmem:[#allocation14 + $0x230] sm:$0xff]
    %v1390 = vld [vmem:[#allocation14 + $0x238] sm:$0xff]
    %v1391 = vld [vmem:[#allocation14 + $0x240] sm:$0xff]
    %v1392 = vld [vmem:[#allocation14 + $0x248] sm:$0xff]
    %v1393 = vld [vmem:[#allocation14 + $0x250] sm:$0xff]
    %v1394 = vld [vmem:[#allocation14 + $0x258] sm:$0xff]
    %v1395 = vld [vmem:[#allocation14 + $0x260] sm:$0xff]
    %v1396 = vld [vmem:[#allocation14 + $0x268] sm:$0xff]
    %v1397 = vld [vmem:[#allocation14 + $0x270] sm:$0xff]
    %v1398 = vld [vmem:[#allocation14 + $0x278] sm:$0xff]
    %v1399 = vld [vmem:[#allocation14 + $0x280] sm:$0xff]
    %v1400 = vld [vmem:[#allocation14 + $0x288] sm:$0xff]
    %v1401 = vld [vmem:[#allocation14 + $0x290] sm:$0xff]
    %v1402 = vld [vmem:[#allocation14 + $0x298] sm:$0xff]
    %v1403 = vld [vmem:[#allocation14 + $0x2a0] sm:$0xff]
    %v1404 = vld [vmem:[#allocation14 + $0x2a8] sm:$0xff]
    %v1405 = vld [vmem:[#allocation14 + $0x2b0] sm:$0xff]
    %v1406 = vld [vmem:[#allocation14 + $0x2b8] sm:$0xff]
    %v1407 = vld [vmem:[#allocation14 + $0x2c0] sm:$0xff]
    %v1408 = vld [vmem:[#allocation14 + $0x2c8] sm:$0xff]
    %v1409 = vld [vmem:[#allocation14 + $0x2d0] sm:$0xff]
    %v1410 = vld [vmem:[#allocation14 + $0x2d8] sm:$0xff]
    %v1411 = vld [vmem:[#allocation14 + $0x2e0] sm:$0xff]
    %v1412 = vld [vmem:[#allocation14 + $0x2e8] sm:$0xff]
    %v1413 = vld [vmem:[#allocation14 + $0x2f0] sm:$0xff]
    %v1414 = vld [vmem:[#allocation14 + $0x2f8] sm:$0xff]
    %v1415 = vld [vmem:[#allocation14 + $0x300] sm:$0xff]
    %v1416 = vld [vmem:[#allocation14 + $0x308] sm:$0xff]
    %v1417 = vld [vmem:[#allocation14 + $0x310] sm:$0xff]
    %v1418 = vld [vmem:[#allocation14 + $0x318] sm:$0xff]
    %v1419 = vld [vmem:[#allocation14 + $0x320] sm:$0xff]
    %v1420 = vld [vmem:[#allocation14 + $0x328] sm:$0xff]
    %v1421 = vld [vmem:[#allocation14 + $0x330] sm:$0xff]
    %v1422 = vld [vmem:[#allocation14 + $0x338] sm:$0xff]
    %v1423 = vld [vmem:[#allocation14 + $0x340] sm:$0xff]
    %v1424 = vld [vmem:[#allocation14 + $0x348] sm:$0xff]
    %v1425 = vld [vmem:[#allocation14 + $0x350] sm:$0xff]
    %v1426 = vld [vmem:[#allocation14 + $0x358] sm:$0xff]
    %v1427 = vld [vmem:[#allocation14 + $0x360] sm:$0xff]
    %v1428 = vld [vmem:[#allocation14 + $0x368] sm:$0xff]
    %v1429 = vld [vmem:[#allocation14 + $0x370] sm:$0xff]
    %v1430 = vld [vmem:[#allocation14 + $0x378] sm:$0xff]
    %v1431 = vld [vmem:[#allocation14 + $0x380] sm:$0xff]
    %v1432 = vld [vmem:[#allocation14 + $0x388] sm:$0xff]
    %v1433 = vld [vmem:[#allocation14 + $0x390] sm:$0xff]
    %v1434 = vld [vmem:[#allocation14 + $0x398] sm:$0xff]
    %v1435 = vld [vmem:[#allocation14 + $0x3a0] sm:$0xff]
    %v1436 = vld [vmem:[#allocation14 + $0x3a8] sm:$0xff]
    %v1437 = vld [vmem:[#allocation14 + $0x3b0] sm:$0xff]
    %v1438 = vld [vmem:[#allocation14 + $0x3b8] sm:$0xff]
    %v1439 = vld [vmem:[#allocation14 + $0x3c0] sm:$0xff]
    %v1440 = vld [vmem:[#allocation14 + $0x3c8] sm:$0xff]
    %v1441 = vld [vmem:[#allocation14 + $0x3d0] sm:$0xff]
    %v1442 = vld [vmem:[#allocation14 + $0x3d8] sm:$0xff]
    %v1443 = vld [vmem:[#allocation14 + $0x3e0] sm:$0xff]
    %v1444 = vld [vmem:[#allocation14 + $0x3e8] sm:$0xff]
    %v1445 = vld [vmem:[#allocation14 + $0x3f0] sm:$0xff]
    %v1446 = vld [vmem:[#allocation14 + $0x3f8] sm:$0xff]
    %v1447 = vld [vmem:[#allocation14 + $0x400] sm:$0xff]
    %v1448 = vld [vmem:[#allocation14 + $0x408] sm:$0xff]
    %v1449 = vld [vmem:[#allocation14 + $0x410] sm:$0xff]
    %v1450 = vld [vmem:[#allocation14 + $0x418] sm:$0xff]
    %v1451 = vld [vmem:[#allocation14 + $0x420] sm:$0xff]
    %v1452 = vld [vmem:[#allocation14 + $0x428] sm:$0xff]
    %v1453 = vld [vmem:[#allocation14 + $0x430] sm:$0xff]
    %v1454 = vld [vmem:[#allocation14 + $0x438] sm:$0xff]
    %v1455 = vld [vmem:[#allocation14 + $0x440] sm:$0xff]
    %v1456 = vld [vmem:[#allocation14 + $0x448] sm:$0xff]
    %v1457 = vld [vmem:[#allocation14 + $0x450] sm:$0xff]
    %v1458 = vld [vmem:[#allocation14 + $0x458] sm:$0xff]
    %v1459 = vld [vmem:[#allocation14 + $0x460] sm:$0xff]
    %v1460 = vld [vmem:[#allocation14 + $0x468] sm:$0xff]
    %v1461 = vld [vmem:[#allocation14 + $0x470] sm:$0xff]
    %v1462 = vld [vmem:[#allocation14 + $0x478] sm:$0xff]
    %v1463 = vld [vmem:[#allocation14 + $0x480] sm:$0xff]
    %v1464 = vld [vmem:[#allocation14 + $0x488] sm:$0xff]
    %v1465 = vld [vmem:[#allocation14 + $0x490] sm:$0xff]
    %v1466 = vld [vmem:[#allocation14 + $0x498] sm:$0xff]
    %v1467 = vld [vmem:[#allocation14 + $0x4a0] sm:$0xff]
    %v1468 = vld [vmem:[#allocation14 + $0x4a8] sm:$0xff]
    %v1469 = vld [vmem:[#allocation14 + $0x4b0] sm:$0xff]
    %v1470 = vld [vmem:[#allocation14 + $0x4b8] sm:$0xff]
    %v1471 = vld [vmem:[#allocation14 + $0x4c0] sm:$0xff]
    %v1472 = vld [vmem:[#allocation14 + $0x4c8] sm:$0xff]
    %v1473 = vld [vmem:[#allocation14 + $0x4d0] sm:$0xff]
    %v1474 = vld [vmem:[#allocation14 + $0x4d8] sm:$0xff]
    %v1475 = vld [vmem:[#allocation14 + $0x4e0] sm:$0xff]
    %v1476 = vld [vmem:[#allocation14 + $0x4e8] sm:$0xff]
    %v1477 = vld [vmem:[#allocation14 + $0x4f0] sm:$0xff]
    %v1478 = vld [vmem:[#allocation14 + $0x4f8] sm:$0xff]
    %v1479 = vld [vmem:[#allocation14 + $0x500] sm:$0xff]
    %v1480 = vld [vmem:[#allocation14 + $0x508] sm:$0xff]
    %v1481 = vld [vmem:[#allocation14 + $0x510] sm:$0xff]
    %v1482 = vld [vmem:[#allocation14 + $0x518] sm:$0xff]
    %v1483 = vld [vmem:[#allocation14 + $0x520] sm:$0xff]
    %v1484 = vld [vmem:[#allocation14 + $0x528] sm:$0xff]
    %v1485 = vld [vmem:[#allocation14 + $0x530] sm:$0xff]
    %v1486 = vld [vmem:[#allocation14 + $0x538] sm:$0xff]
    %v1487 = vld [vmem:[#allocation14 + $0x540] sm:$0xff]
    %v1488 = vld [vmem:[#allocation14 + $0x548] sm:$0xff]
    %v1489 = vld [vmem:[#allocation14 + $0x550] sm:$0xff]
    %v1490 = vld [vmem:[#allocation14 + $0x558] sm:$0xff]
    %v1491 = vld [vmem:[#allocation14 + $0x560] sm:$0xff]
    %v1492 = vld [vmem:[#allocation14 + $0x568] sm:$0xff]
    %v1493 = vld [vmem:[#allocation14 + $0x570] sm:$0xff]
    %v1494 = vld [vmem:[#allocation14 + $0x578] sm:$0xff]
    %v1495 = vld [vmem:[#allocation14 + $0x580] sm:$0xff]
    %v1496 = vld [vmem:[#allocation14 + $0x588] sm:$0xff]
    %v1497 = vld [vmem:[#allocation14 + $0x590] sm:$0xff]
    %v1498 = vld [vmem:[#allocation14 + $0x598] sm:$0xff]
    %v1499 = vld [vmem:[#allocation14 + $0x5a0] sm:$0xff]
    %v1500 = vld [vmem:[#allocation14 + $0x5a8] sm:$0xff]
    %v1501 = vld [vmem:[#allocation14 + $0x5b0] sm:$0xff]
    %v1502 = vld [vmem:[#allocation14 + $0x5b8] sm:$0xff]
    %v1503 = vld [vmem:[#allocation14 + $0x5c0] sm:$0xff]
    %v1504 = vld [vmem:[#allocation14 + $0x5c8] sm:$0xff]
    %v1505 = vld [vmem:[#allocation14 + $0x5d0] sm:$0xff]
    %v1506 = vld [vmem:[#allocation14 + $0x5d8] sm:$0xff]
    %v1507 = vld [vmem:[#allocation14 + $0x5e0] sm:$0xff]
    %v1508 = vld [vmem:[#allocation14 + $0x5e8] sm:$0xff]
    %v1509 = vld [vmem:[#allocation14 + $0x5f0] sm:$0xff]
    %v1510 = vld [vmem:[#allocation14 + $0x5f8] sm:$0xff]
    %v1512 = vlaneseq
    %v1513 = vshrl.u32 %v1512, 7
    %v1514 = vsub.s32 0, %v1513
    %v1515 = vrot.slane %v168, %v1514
    %v1516 = vlaneseq
    %v1517 = vshrl.u32 %v1516, 7
    %v1518 = vsub.s32 1, %v1517
    %v1519 = vrot.slane %v168, %v1518
    %v1520 = vlaneseq
    %v1521 = vshrl.u32 %v1520, 7
    %v1522 = vsub.s32 2, %v1521
    %v1523 = vrot.slane %v168, %v1522
    %v1524 = vlaneseq
    %v1525 = vshrl.u32 %v1524, 7
    %v1526 = vsub.s32 3, %v1525
    %v1527 = vrot.slane %v168, %v1526
    %1532 = vmatprep.subr.mxu0 %v1320
    %1533 = vmatpush1.msra.mxu0 %v1319
    %1534 = vmatprep.subr.mxu0 %v1324
    %1535 = vmatpush1.msra.mxu0 %v1323
    %1536 = vmatprep.subr.mxu0 %v1328
    %1537 = vmatpush1.msra.mxu0 %v1327
    %1538 = vmatprep.subr.mxu0 %v1332
    %1539 = vmatpush1.msra.mxu0 %v1331
    %1540 = vmatprep.subr.mxu0 %v1336
    %1541 = vmatpush1.msra.mxu0 %v1335
    %1542 = vmatprep.subr.mxu0 %v1340
    %1543 = vmatpush1.msra.mxu0 %v1339
    %1544 = vmatprep.subr.mxu0 %v1344
    %1545 = vmatpush1.msra.mxu0 %v1343
    %1546 = vmatprep.subr.mxu0 %v1348
    %1547 = vmatpush1.msra.mxu0 %v1347
    %1548 = vmatprep.subr.mxu0 %v1352
    %1549 = vmatpush1.msra.mxu0 %v1351
    %1550 = vmatprep.subr.mxu0 %v1356
    %1551 = vmatpush1.msra.mxu0 %v1355
    %1552 = vmatprep.subr.mxu0 %v1360
    %1553 = vmatpush1.msra.mxu0 %v1359
    %1554 = vmatprep.subr.mxu0 %v1364
    %1555 = vmatpush1.msra.mxu0 %v1363
    %1556 = vmatprep.subr.mxu0 %v1368
    %1557 = vmatpush1.msra.mxu0 %v1367
    %1558 = vmatprep.subr.mxu0 %v1372
    %1559 = vmatpush1.msra.mxu0 %v1371
    %1560 = vmatprep.subr.mxu0 %v1376
    %1561 = vmatpush1.msra.mxu0 %v1375
    %1562 = vmatprep.subr.mxu0 %v1380
    %1563 = vmatpush1.msra.mxu0 %v1379
    %1564 = vmatprep.subr.mxu0 %v1384
    %1565 = vmatpush1.msra.mxu0 %v1383
    %1566 = vmatprep.subr.mxu0 %v1388
    %1567 = vmatpush1.msra.mxu0 %v1387
    %1568 = vmatprep.subr.mxu0 %v1392
    %1569 = vmatpush1.msra.mxu0 %v1391
    %1570 = vmatprep.subr.mxu0 %v1396
    %1571 = vmatpush1.msra.mxu0 %v1395
    %1572 = vmatprep.subr.mxu0 %v1400
    %1573 = vmatpush1.msra.mxu0 %v1399
    %1574 = vmatprep.subr.mxu0 %v1404
    %1575 = vmatpush1.msra.mxu0 %v1403
    %1576 = vmatprep.subr.mxu0 %v1408
    %1577 = vmatpush1.msra.mxu0 %v1407
    %1578 = vmatprep.subr.mxu0 %v1412
    %1579 = vmatpush1.msra.mxu0 %v1411
    %1580 = vmatprep.subr.mxu0 %v1416
    %1581 = vmatpush1.msra.mxu0 %v1415
    %1582 = vmatprep.subr.mxu0 %v1420
    %1583 = vmatpush1.msra.mxu0 %v1419
    %1584 = vmatprep.subr.mxu0 %v1424
    %1585 = vmatpush1.msra.mxu0 %v1423
    %1586 = vmatprep.subr.mxu0 %v1428
    %1587 = vmatpush1.msra.mxu0 %v1427
    %1588 = vmatprep.subr.mxu0 %v1432
    %1589 = vmatpush1.msra.mxu0 %v1431
    %1590 = vmatprep.subr.mxu0 %v1436
    %1591 = vmatpush1.msra.mxu0 %v1435
    %1592 = vmatprep.subr.mxu0 %v1440
    %1593 = vmatpush1.msra.mxu0 %v1439
    %1594 = vmatprep.subr.mxu0 %v1444
    %1595 = vmatpush1.msra.mxu0 %v1443
    %1596 = vmatprep.mubr.f32.mxu0 %v1317
    %1597 = vmatmul.mubr.f32.gmra.mrb[0].mxu0 %v166
    %v1598 = vpop.f32.mrb[0].mxu0
    %v1599 = vadd.f32 %v1515, %v1598
    %v1600 = vpop.f32.mrb[0].mxu0
    %v1601 = vadd.f32 %v1519, %v1600
    %1602 = vdwg.mxu0
    %1603 = vmatprep.subr.mxu0 %v1448
    %1604 = vmatpush1.msra.mxu0 %v1447
    %1605 = vmatprep.subr.mxu0 %v1452
    %1606 = vmatpush1.msra.mxu0 %v1451
    %1607 = vmatprep.subr.mxu0 %v1456
    %1608 = vmatpush1.msra.mxu0 %v1455
    %1609 = vmatprep.subr.mxu0 %v1460
    %1610 = vmatpush1.msra.mxu0 %v1459
    %1611 = vmatprep.subr.mxu0 %v1464
    %1612 = vmatpush1.msra.mxu0 %v1463
    %1613 = vmatprep.subr.mxu0 %v1468
    %1614 = vmatpush1.msra.mxu0 %v1467
    %1615 = vmatprep.subr.mxu0 %v1472
    %1616 = vmatpush1.msra.mxu0 %v1471
    %1617 = vmatprep.subr.mxu0 %v1476
    %1618 = vmatpush1.msra.mxu0 %v1475
    %1619 = vmatprep.subr.mxu0 %v1480
    %1620 = vmatpush1.msra.mxu0 %v1479
    %1621 = vmatprep.subr.mxu0 %v1484
    %1622 = vmatpush1.msra.mxu0 %v1483
    %1623 = vmatprep.subr.mxu0 %v1488
    %1624 = vmatpush1.msra.mxu0 %v1487
    %1625 = vmatprep.subr.mxu0 %v1492
    %1626 = vmatpush1.msra.mxu0 %v1491
    %1627 = vmatprep.subr.mxu0 %v1496
    %1628 = vmatpush1.msra.mxu0 %v1495
    %1629 = vmatprep.subr.mxu0 %v1500
    %1630 = vmatpush1.msra.mxu0 %v1499
    %1631 = vmatprep.subr.mxu0 %v1504
    %1632 = vmatpush1.msra.mxu0 %v1503
    %1633 = vmatprep.subr.mxu0 %v1508
    %1634 = vmatpush1.msra.mxu0 %v1507
    %1635 = vmatprep.subr.mxu0 0.0
    %1636 = vmatpush1.msra.mxu0 0.0
    %1637 = vmatprep.subr.mxu0 0.0
    %1638 = vmatpush1.msra.mxu0 0.0
    %1639 = vmatprep.subr.mxu0 0.0
    %1640 = vmatpush1.msra.mxu0 0.0
    %1641 = vmatprep.subr.mxu0 0.0
    %1642 = vmatpush1.msra.mxu0 0.0
    %1643 = vmatprep.subr.mxu0 0.0
    %1644 = vmatpush1.msra.mxu0 0.0
    %1645 = vmatprep.subr.mxu0 0.0
    %1646 = vmatpush1.msra.mxu0 0.0
    %1647 = vmatprep.subr.mxu0 0.0
    %1648 = vmatpush1.msra.mxu0 0.0
    %1649 = vmatprep.subr.mxu0 0.0
    %1650 = vmatpush1.msra.mxu0 0.0
    %1651 = vmatprep.subr.mxu0 0.0
    %1652 = vmatpush1.msra.mxu0 0.0
    %1653 = vmatprep.subr.mxu0 0.0
    %1654 = vmatpush1.msra.mxu0 0.0
    %1655 = vmatprep.subr.mxu0 0.0
    %1656 = vmatpush1.msra.mxu0 0.0
    %1657 = vmatprep.subr.mxu0 0.0
    %1658 = vmatpush1.msra.mxu0 0.0
    %1659 = vmatprep.subr.mxu0 0.0
    %1660 = vmatpush1.msra.mxu0 0.0
    %1661 = vmatprep.subr.mxu0 0.0
    %1662 = vmatpush1.msra.mxu0 0.0
    %1663 = vmatprep.subr.mxu0 0.0
    %1664 = vmatpush1.msra.mxu0 0.0
    %1665 = vmatprep.subr.mxu0 0.0
    %1666 = vmatpush1.msra.mxu0 0.0
    %1667 = vmatprep.mubr.f32.mxu0 0.0
    %1668 = vmatmul.mubr.f32.gmra.mrb[0].mxu0 %v148
    %v1669 = vpop.f32.mrb[0].mxu0
    %v1670 = vadd.f32 %v1599, %v1669
    %v1671 = vpop.f32.mrb[0].mxu0
    %v1672 = vadd.f32 %v1601, %v1671
    %1673 = vdwg.mxu0
    %1674 = vmatprep.subr.mxu0 %v1322
    %1675 = vmatpush1.msra.mxu0 %v1321
    %1676 = vmatprep.subr.mxu0 %v1326
    %1677 = vmatpush1.msra.mxu0 %v1325
    %1678 = vmatprep.subr.mxu0 %v1330
    %1679 = vmatpush1.msra.mxu0 %v1329
    %1680 = vmatprep.subr.mxu0 %v1334
    %1681 = vmatpush1.msra.mxu0 %v1333
    %1682 = vmatprep.subr.mxu0 %v1338
    %1683 = vmatpush1.msra.mxu0 %v1337
    %1684 = vmatprep.subr.mxu0 %v1342
    %1685 = vmatpush1.msra.mxu0 %v1341
    %1686 = vmatprep.subr.mxu0 %v1346
    %1687 = vmatpush1.msra.mxu0 %v1345
    %1688 = vmatprep.subr.mxu0 %v1350
    %1689 = vmatpush1.msra.mxu0 %v1349
    %1690 = vmatprep.subr.mxu0 %v1354
    %1691 = vmatpush1.msra.mxu0 %v1353
    %1692 = vmatprep.subr.mxu0 %v1358
    %1693 = vmatpush1.msra.mxu0 %v1357
    %1694 = vmatprep.subr.mxu0 %v1362
    %1695 = vmatpush1.msra.mxu0 %v1361
    %1696 = vmatprep.subr.mxu0 %v1366
    %1697 = vmatpush1.msra.mxu0 %v1365
    %1698 = vmatprep.subr.mxu0 %v1370
    %1699 = vmatpush1.msra.mxu0 %v1369
    %1700 = vmatprep.subr.mxu0 %v1374
    %1701 = vmatpush1.msra.mxu0 %v1373
    %1702 = vmatprep.subr.mxu0 %v1378
    %1703 = vmatpush1.msra.mxu0 %v1377
    %1704 = vmatprep.subr.mxu0 %v1382
    %1705 = vmatpush1.msra.mxu0 %v1381
    %1706 = vmatprep.subr.mxu0 %v1386
    %1707 = vmatpush1.msra.mxu0 %v1385
    %1708 = vmatprep.subr.mxu0 %v1390
    %1709 = vmatpush1.msra.mxu0 %v1389
    %1710 = vmatprep.subr.mxu0 %v1394
    %1711 = vmatpush1.msra.mxu0 %v1393
    %1712 = vmatprep.subr.mxu0 %v1398
    %1713 = vmatpush1.msra.mxu0 %v1397
    %1714 = vmatprep.subr.mxu0 %v1402
    %1715 = vmatpush1.msra.mxu0 %v1401
    %1716 = vmatprep.subr.mxu0 %v1406
    %1717 = vmatpush1.msra.mxu0 %v1405
    %1718 = vmatprep.subr.mxu0 %v1410
    %1719 = vmatpush1.msra.mxu0 %v1409
    %1720 = vmatprep.subr.mxu0 %v1414
    %1721 = vmatpush1.msra.mxu0 %v1413
    %1722 = vmatprep.subr.mxu0 %v1418
    %1723 = vmatpush1.msra.mxu0 %v1417
    %1724 = vmatprep.subr.mxu0 %v1422
    %1725 = vmatpush1.msra.mxu0 %v1421
    %1726 = vmatprep.subr.mxu0 %v1426
    %1727 = vmatpush1.msra.mxu0 %v1425
    %1728 = vmatprep.subr.mxu0 %v1430
    %1729 = vmatpush1.msra.mxu0 %v1429
    %1730 = vmatprep.subr.mxu0 %v1434
    %1731 = vmatpush1.msra.mxu0 %v1433
    %1732 = vmatprep.subr.mxu0 %v1438
    %1733 = vmatpush1.msra.mxu0 %v1437
    %1734 = vmatprep.subr.mxu0 %v1442
    %1735 = vmatpush1.msra.mxu0 %v1441
    %1736 = vmatprep.subr.mxu0 %v1446
    %1737 = vmatpush1.msra.mxu0 %v1445
    %1738 = vmatprep.mubr.f32.mxu0 %v1317
    %1739 = vmatmul.mubr.f32.gmra.mrb[0].mxu0 %v166
    %v1740 = vpop.f32.mrb[0].mxu0
    %v1741 = vadd.f32 %v1523, %v1740
    %v1742 = vpop.f32.mrb[0].mxu0
    %v1743 = vadd.f32 %v1527, %v1742
    %1744 = vdwg.mxu0
    %1745 = vmatprep.subr.mxu0 %v1450
    %1746 = vmatpush1.msra.mxu0 %v1449
    %1747 = vmatprep.subr.mxu0 %v1454
    %1748 = vmatpush1.msra.mxu0 %v1453
    %1749 = vmatprep.subr.mxu0 %v1458
    %1750 = vmatpush1.msra.mxu0 %v1457
    %1751 = vmatprep.subr.mxu0 %v1462
    %1752 = vmatpush1.msra.mxu0 %v1461
    %1753 = vmatprep.subr.mxu0 %v1466
    %1754 = vmatpush1.msra.mxu0 %v1465
    %1755 = vmatprep.subr.mxu0 %v1470
    %1756 = vmatpush1.msra.mxu0 %v1469
    %1757 = vmatprep.subr.mxu0 %v1474
    %1758 = vmatpush1.msra.mxu0 %v1473
    %1759 = vmatprep.subr.mxu0 %v1478
    %1760 = vmatpush1.msra.mxu0 %v1477
    %1761 = vmatprep.subr.mxu0 %v1482
    %1762 = vmatpush1.msra.mxu0 %v1481
    %1763 = vmatprep.subr.mxu0 %v1486
    %1764 = vmatpush1.msra.mxu0 %v1485
    %1765 = vmatprep.subr.mxu0 %v1490
    %1766 = vmatpush1.msra.mxu0 %v1489
    %1767 = vmatprep.subr.mxu0 %v1494
    %1768 = vmatpush1.msra.mxu0 %v1493
    %1769 = vmatprep.subr.mxu0 %v1498
    %1770 = vmatpush1.msra.mxu0 %v1497
    %1771 = vmatprep.subr.mxu0 %v1502
    %1772 = vmatpush1.msra.mxu0 %v1501
    %1773 = vmatprep.subr.mxu0 %v1506
    %1774 = vmatpush1.msra.mxu0 %v1505
    %1775 = vmatprep.subr.mxu0 %v1510
    %1776 = vmatpush1.msra.mxu0 %v1509
    %1777 = vmatprep.subr.mxu0 0.0
    %1778 = vmatpush1.msra.mxu0 0.0
    %1779 = vmatprep.subr.mxu0 0.0
    %1780 = vmatpush1.msra.mxu0 0.0
    %1781 = vmatprep.subr.mxu0 0.0
    %1782 = vmatpush1.msra.mxu0 0.0
    %1783 = vmatprep.subr.mxu0 0.0
    %1784 = vmatpush1.msra.mxu0 0.0
    %1785 = vmatprep.subr.mxu0 0.0
    %1786 = vmatpush1.msra.mxu0 0.0
    %1787 = vmatprep.subr.mxu0 0.0
    %1788 = vmatpush1.msra.mxu0 0.0
    %1789 = vmatprep.subr.mxu0 0.0
    %1790 = vmatpush1.msra.mxu0 0.0
    %1791 = vmatprep.subr.mxu0 0.0
    %1792 = vmatpush1.msra.mxu0 0.0
    %1793 = vmatprep.subr.mxu0 0.0
    %1794 = vmatpush1.msra.mxu0 0.0
    %1795 = vmatprep.subr.mxu0 0.0
    %1796 = vmatpush1.msra.mxu0 0.0
    %1797 = vmatprep.subr.mxu0 0.0
    %1798 = vmatpush1.msra.mxu0 0.0
    %1799 = vmatprep.subr.mxu0 0.0
    %1800 = vmatpush1.msra.mxu0 0.0
    %1801 = vmatprep.subr.mxu0 0.0
    %1802 = vmatpush1.msra.mxu0 0.0
    %1803 = vmatprep.subr.mxu0 0.0
    %1804 = vmatpush1.msra.mxu0 0.0
    %1805 = vmatprep.subr.mxu0 0.0
    %1806 = vmatpush1.msra.mxu0 0.0
    %1807 = vmatprep.subr.mxu0 0.0
    %1808 = vmatpush1.msra.mxu0 0.0
    %1809 = vmatprep.mubr.f32.mxu0 0.0
    %1810 = vmatmul.mubr.f32.gmra.mrb[0].mxu0 %v148
    %v1811 = vpop.f32.mrb[0].mxu0
    %v1812 = vadd.f32 %v1741, %v1811
    %v1813 = vpop.f32.mrb[0].mxu0
    %v1814 = vadd.f32 %v1743, %v1813
    %1815 = vdwg.mxu0
    %v1816 = vxor.u32 %v1670, 2147483648
    %v1817 = vmul.f32 %v1816, 1.442695
    %v1818 = vpow.pop %v1817
    %v1819 = vadd.f32 %v1818, 1.0
    %v1820 = vrcp.pop %v1819
    %v1821 = vmul.f32 1.0, %v1820
    %v1822 = vxor.u32 %v1672, 2147483648
    %v1823 = vmul.f32 %v1822, 1.442695
    %v1824 = vpow.pop %v1823
    %v1825 = vadd.f32 %v1824, 1.0
    %v1826 = vrcp.pop %v1825
    %v1827 = vmul.f32 1.0, %v1826
    %v1828 = vtanh.pop %v1812
    %v1829 = vxor.u32 %v1814, 2147483648
    %v1830 = vmul.f32 %v1829, 1.442695
    %v1831 = vpow.pop %v1830
    %v1832 = vadd.f32 %v1831, 1.0
    %v1833 = vrcp.pop %v1832
    %v1834 = vmul.f32 1.0, %v1833
    %v1835 = vmul.f32 %v1827, %v149
    %v1836 = vmul.f32 %v1821, %v1828
    %v1837 = vadd.f32 %v1835, %v1836
    %v1838 = vtanh.pop %v1837
    %v1839 = vmul.f32 %v1834, %v1838
    %1840 = vst [vmem:[#allocation17] sm:$0xff] %v1839
    %1841 = vst [vmem:[#allocation18] sm:$0xff] %v1837
    // Predicated region
    $region74: #{decoder_forward.3} parent=1 // pred_check
      _
    $region75: #{decoder_forward.3} parent=1 // pred_check_branch
      %1843 = sbr.rel (0) target = $region77
    $region76: #{decoder_forward.3} parent=1 // pred_region
      %s1845 = ssub.s32 128, 128
      %1846 = vsyncadd [#allocation4], %s1845
      %s1848 = sshll.u32 [#allocation17], 4
      %s1849 = int_to_ptr.vmem [resolvable:$true] %s1848
      %1851 = dma.vmem_to_hbm [thread:$0]  %s1849, 128, %s9, [#allocation4]
    $region77: #{decoder_forward.3} parent=1 // pred_fallthru
      _
    // Predicated region
    $region78: #{decoder_forward.3} parent=1 // pred_check
      _
    $region79: #{decoder_forward.3} parent=1 // pred_check_branch
      %1853 = sbr.rel (0) target = $region81
    $region80: #{decoder_forward.3} parent=1 // pred_region
      %s1855 = ssub.s32 128, 128
      %1856 = vsyncadd [#allocation19], %s1855
      %s1858 = sshll.u32 [#allocation18], 4
      %s1859 = int_to_ptr.vmem [resolvable:$true] %s1858
      %1861 = dma.vmem_to_hbm [thread:$0]  %s1859, 128, %s10, [#allocation19]
    $region81: #{decoder_forward.3} parent=1 // pred_fallthru
      _
    // Predicated region
    $region82: #{decoder_forward.3} parent=1 // pred_check
      _
    $region83: #{decoder_forward.3} parent=1 // pred_check_branch
      %1863 = sbr.rel (0) target = $region85
    $region84: #{decoder_forward.3} parent=1 // pred_region
      %1864 = dma.done [#allocation4], 128
    $region85: #{decoder_forward.3} parent=1 // pred_fallthru
      _
    // Predicated region
    $region86: #{decoder_forward.3} parent=1 // pred_check
      _
    $region87: #{decoder_forward.3} parent=1 // pred_check_branch
      %1866 = sbr.rel (0) target = $region89
    $region88: #{decoder_forward.3} parent=1 // pred_region
      %1867 = dma.done [#allocation19], 128
    $region89: #{decoder_forward.3} parent=1 // pred_fallthru
      _
    %1868 = vsyncpa [#allocation3], 1
    %1869 = vsyncpa [#allocation6], 1
    %1870 = vsyncpa [#allocation9], 1
    %1871 = vsyncpa [#allocation12], 1
    %1872 = vsyncpa [#allocation15], 1
    %1873 = vsyncpa [#allocation4], 1
    %1874 = vsyncpa [#allocation19], 1

</llo_original>
